<compile_context>
chip_gen: v7x
topology: tpu7x:2x2x1
jax: 0.10.0
libtpu: 0.0.40
codegen_flags: <defaults>
</compile_context>

<pallas_src>
import functools

import jax
import jax.numpy as jnp
from jax import lax
from jax.experimental import pallas as pl
from jax.experimental.pallas import tpu as pltpu


def _cdiv(a, b):
    return -(-a // b)


def _round_up(n, m):
    return ((n + m - 1) // m) * m


def _choose_tb(n, c, hw, in_bytes):
    """Batch-tile size: multiple of 8, minimal tail padding, >=2 grid steps
    when possible (v7x has 2 TensorCores), capped by a VMEM budget for the
    double-buffered x block."""
    cap = max(8, ((24 << 20) // max(1, 2 * c * hw * in_bytes)) // 8 * 8)
    min_blocks = max(1, _cdiv(n, 128))
    if n >= 16:
        min_blocks = max(min_blocks, 2)          # keep v7x's 2nd TC busy
    best = None
    for nb in range(min_blocks, min_blocks + 8):
        tb = min(cap, _round_up(_cdiv(n, nb), 8))
        waste = _round_up(n, tb) - n
        if best is None or waste < best[0]:
            best = (waste, tb)
        if waste == 0:
            break
    return best[1]


def _choose_chunk(hw, e, sb):
    """Lane-chunk of the HW axis so the streamed [SB, E, chunk] intermediate
    stays roughly <= 32 vregs (lives in registers, no VMEM round-trips)."""
    if hw % 128 != 0:
        return hw                                 # tiny / unaligned: one chunk
    budget = 32 * 1024                            # f32 elements (~32 vregs)
    chunk = max(128, min(hw, (budget // max(1, sb * e)) // 128 * 128))
    while hw % chunk != 0:
        chunk -= 128                              # 128 always divides hw here
    return chunk


def _multicrop_kernel(x_ref, wct_ref, bct_ref, w1s_ref, b1_ref, w2_ref, b2_ref,
                      out_ref, *, hw, chunk, sb):
    """One grid step = TB samples.

    x block layout is [TB, C*HW] (pure reshape of NCHW, fully (8,128)-dense);
    channel c of an HW chunk sits at lane offset c*HW + off.  The backbone
    (1x1 conv + bias + ReLU + global average pool) is streamed over HW chunks
    and SB-row batch sub-blocks; only the [TB, E] pooled sum survives.  The
    1/HW pool scale is folded into w1 by the wrapper.
    """
    tb = out_ref.shape[0]
    c_in = wct_ref.shape[1]
    n_chunks = hw // chunk

    wct = wct_ref[...].astype(jnp.float32)            # [E, C]
    bias = bct_ref[...][None].astype(jnp.float32)     # [1, E, 1]

    def conv_pool_chunk(b0, lane_off):
        # ReLU'd pooled partial sum over one HW chunk for SB samples -> [SB, E]
        x0 = x_ref[pl.ds(b0, sb), pl.ds(lane_off, chunk)].astype(jnp.float32)
        h = bias + x0[:, None, :] * wct[None, :, 0:1]          # start from bias
        for c in range(1, c_in):                               # C is tiny/static
            xc = x_ref[pl.ds(b0, sb), pl.ds(c * hw + lane_off, chunk)]
            h = h + xc.astype(jnp.float32)[:, None, :] * wct[None, :, c:c + 1]
        h = jnp.maximum(h, 0.0)
        return jnp.sum(h, axis=-1)                             # lane (XLU) reduce

    emb_rows = []
    for b0 in range(0, tb, sb):                       # <=16 sub-blocks, static
        acc = conv_pool_chunk(b0, 0)
        if n_chunks > 1:
            if n_chunks <= 4:                         # short: unroll statically
                for j in range(1, n_chunks):
                    acc = acc + conv_pool_chunk(b0, j * chunk)
            else:                                     # long: bounded fori_loop
                def body(j, a, b0=b0):
                    off = pl.multiple_of(j * chunk, chunk)
                    return a + conv_pool_chunk(b0, off)
                acc = lax.fori_loop(1, n_chunks, body, acc)
        emb_rows.append(acc)
    emb = emb_rows[0] if len(emb_rows) == 1 else jnp.concatenate(emb_rows, 0)

    # --- head: Linear -> GELU -> Linear on the MXU (M = TB rows) -------------
    z = jnp.dot(emb, w1s_ref[...], preferred_element_type=jnp.float32)
    z = z + b1_ref[...]
    # TODO(synk): PyTorch nn.GELU defaults to the exact erf form; tanh-approx
    # GELU is used here (the in-file reference matches).
    z = jax.nn.gelu(z, approximate=True)
    logits = jnp.dot(z, w2_ref[...], preferred_element_type=jnp.float32)
    logits = logits + b2_ref[...]
    out_ref[...] = logits.astype(out_ref.dtype)


def multicrop_forward(crops, params, *, input_dtype=None):
    """crops: tuple of NCHW arrays, all the same shape [B, C, H, W].
    Returns a tuple of n_crops logits arrays, each [B, K] (same as .chunk)."""
    n_crops = len(crops)
    x = jnp.concatenate(crops, axis=0)                # torch.cat(x, dim=0)
    N, C, H, W = x.shape
    HW = H * W
    x = x.reshape(N, C * HW)                          # pure reshape of NCHW
    if input_dtype is not None:
        # bf16 input DMA halves the dominant HBM stream on v6e/v7x; the kernel
        # upcasts each chunk to f32 before the FMA chain (v5e-safe).
        x = x.astype(input_dtype)
    in_bytes = x.dtype.itemsize

    wc, bc, w1, b1, w2, b2 = (params["wc"], params["bc"], params["w1"],
                              params["b1"], params["w2"], params["b2"])
    E, Hd, K = wc.shape[1], w1.shape[1], w2.shape[1]
    # tiny weight re-layouts / folds (done once, outside the hot path)
    wct = wc.T                                        # [E, C]
    bct = bc.T                                        # [E, 1]
    w1s = w1 * (1.0 / float(HW))                      # fold 1/HW pool scale

    TB = _choose_tb(N, C, HW, in_bytes)
    Npad = _round_up(N, TB)
    if Npad != N:
        x = jnp.pad(x, ((0, Npad - N), (0, 0)))
    grid = (Npad // TB,)

    SB = 8
    CHUNK = _choose_chunk(HW, E, SB)

    # Explicit VMEM limit: double-buffered x/out blocks + weights, with slack
    # (v5e default scoped limit is 16 MiB; v7x physical VMEM is only 64 MiB).
    w_bytes = 4 * (E * C + E + E * Hd + Hd + Hd * K + K)
    vmem_need = 2 * (TB * C * HW * in_bytes + TB * K * 4) + 2 * w_bytes
    vmem_limit = int(min(48 << 20, max(2 * vmem_need + (4 << 20), 16 << 20)))

    flops = 2 * Npad * (HW * C * E + E * Hd + Hd * K)
    bytes_accessed = Npad * C * HW * in_bytes + 4 * Npad * K + w_bytes
    cost = pl.CostEstimate(flops=flops, transcendentals=Npad * Hd,
                           bytes_accessed=bytes_accessed)

    kernel = functools.partial(_multicrop_kernel, hw=HW, chunk=CHUNK, sb=SB)
    full = lambda i: (0, 0)
    logits = pl.pallas_call(
        kernel,
        out_shape=jax.ShapeDtypeStruct((Npad, K), jnp.float32),
        grid_spec=pltpu.PrefetchScalarGridSpec(
            num_scalar_prefetch=0,
            grid=grid,
            in_specs=[
                pl.BlockSpec((TB, C * HW), lambda i: (i, 0)),   # x (TB samples)
                pl.BlockSpec((E, C), full),                     # conv weight^T
                pl.BlockSpec((E, 1), full),                     # conv bias^T
                pl.BlockSpec((E, Hd), full),                    # head w1 * 1/HW
                pl.BlockSpec((1, Hd), full),                    # head b1
                pl.BlockSpec((Hd, K), full),                    # head w2
                pl.BlockSpec((1, K), full),                     # head b2
            ],
            out_specs=pl.BlockSpec((TB, K), lambda i: (i, 0)),
        ),
        compiler_params=pltpu.CompilerParams(
            dimension_semantics=("parallel",),
            vmem_limit_bytes=vmem_limit),
        cost_estimate=cost,
    )(x, wct, bct, w1s, b1, w2, b2)

    logits = logits[:N]
    # logits.chunk(n_crops) along dim 0
    return tuple(jnp.split(logits, n_crops, axis=0))


def make_params(C, E, Hd, K):
    """Deterministic synthetic weights for the backbone + head."""
    key = jax.random.PRNGKey(42)
    ks = jax.random.split(key, 6)
    return {
        "wc": jax.random.normal(ks[0], (C, E), jnp.float32) * 0.1,
        "bc": jax.random.normal(ks[1], (1, E), jnp.float32) * 0.01,
        "w1": jax.random.normal(ks[2], (E, Hd), jnp.float32) * 0.1,
        "b1": jax.random.normal(ks[3], (1, Hd), jnp.float32) * 0.01,
        "w2": jax.random.normal(ks[4], (Hd, K), jnp.float32) * 0.1,
        "b2": jax.random.normal(ks[5], (1, K), jnp.float32) * 0.01,
    }


def _reference(crops, params):
    """Pure-JAX reference matching the PyTorch semantics (NHWC formulation,
    independent of the kernel's layout/streaming)."""
    x = jnp.concatenate(crops, axis=0)
    N, C, H, W = x.shape
    x = jnp.transpose(x, (0, 2, 3, 1)).reshape(N, H * W, C)
    h = jnp.maximum(jnp.einsum("nsc,ce->nse", x, params["wc"]) + params["bc"], 0.0)
    emb = jnp.mean(h, axis=1)
    z = jax.nn.gelu(emb @ params["w1"] + params["b1"], approximate=True)
    logits = z @ params["w2"] + params["b2"]
    return tuple(jnp.split(logits, len(crops), axis=0))


if __name__ == "__main__":
    # 3 crops (2 "global" + 1 "local"), each [B=2, C=4, H=16, W=16].
    # TODO(synk): real DINO local crops have a smaller spatial size; torch.cat
    # along dim=0 requires equal spatial dims, so all crops share H=W here.
    B, C, H, W = 2, 4, 16, 16
    E, Hd, K = 32, 64, 128
    n_crops = 3

    key = jax.random.PRNGKey(0)
    keys = jax.random.split(key, n_crops)
    crops = tuple(jax.random.normal(k, (B, C, H, W), jnp.float32) for k in keys)
    params = make_params(C, E, Hd, K)

    # f32 path (numerically faithful to the f32 module).
    out = jax.block_until_ready(multicrop_forward(crops, params))
    ref = _reference(crops, params)
    assert len(out) == n_crops
    for o, r in zip(out, ref):
        assert o.shape == (B, K), o.shape
        assert jnp.allclose(o, r, atol=1e-4, rtol=1e-4), \
            float(jnp.max(jnp.abs(o - r)))

    # Larger N: exercises the multi-block grid (v7x 2-TC sharding), the SB
    # sub-batch loop + row concat, and the balanced-TB tail handling.
    B2, n_crops2 = 8, 4
    keys2 = jax.random.split(jax.random.PRNGKey(1), n_crops2)
    crops2 = tuple(jax.random.normal(k, (B2, C, H, W), jnp.float32)
                   for k in keys2)
    out2 = jax.block_until_ready(multicrop_forward(crops2, params))
    ref2 = _reference(crops2, params)
    for o, r in zip(out2, ref2):
        assert o.shape == (B2, K), o.shape
        assert jnp.allclose(o, r, atol=1e-4, rtol=1e-4), \
            float(jnp.max(jnp.abs(o - r)))

    # bf16 input-DMA path (v6e/v7x perf option; f32 accumulation in-kernel).
    out_bf = jax.block_until_ready(
        multicrop_forward(crops, params, input_dtype=jnp.bfloat16))
    crops_q = tuple(c.astype(jnp.bfloat16).astype(jnp.float32) for c in crops)
    ref_q = _reference(crops_q, params)
    for o, r in zip(out_bf, ref_q):
        assert o.shape == (B, K), o.shape
        assert jnp.allclose(o, r, atol=2e-3, rtol=2e-3), \
            float(jnp.max(jnp.abs(o - r)))

    print("KERNEL_OK")
</pallas_src>

<mosaic_0001>
module attributes {stable_mosaic.version = 11 : i64} {
  func.func @_multicrop_kernel(%arg0: i32, %arg1: memref<8x1024xf32, #tpu.memory_space<vmem>>, %arg2: memref<32x4xf32, #tpu.memory_space<vmem>>, %arg3: memref<32x1xf32, #tpu.memory_space<vmem>>, %arg4: memref<32x64xf32, #tpu.memory_space<vmem>>, %arg5: memref<1x64xf32, #tpu.memory_space<vmem>>, %arg6: memref<64x128xf32, #tpu.memory_space<vmem>>, %arg7: memref<1x128xf32, #tpu.memory_space<vmem>>, %arg8: memref<8x128xf32, #tpu.memory_space<vmem>>) attributes {dimension_semantics = [#tpu.dimension_semantics<parallel>], iteration_bounds = array<i64: 1>, scalar_prefetch = 0 : i64, scratch_operands = 0 : i64, tpu.core_type = #tpu.core_type<tc>, window_params = [{transform_indices = @transform_0, window_bounds = array<i64: 8, 1024>}, {pipeline_mode = #tpu.pipeline_mode<synchronous>, transform_indices = @transform_1, window_bounds = array<i64: 32, 4>}, {pipeline_mode = #tpu.pipeline_mode<synchronous>, transform_indices = @transform_2, window_bounds = array<i64: 32, 1>}, {pipeline_mode = #tpu.pipeline_mode<synchronous>, transform_indices = @transform_3, window_bounds = array<i64: 32, 64>}, {pipeline_mode = #tpu.pipeline_mode<synchronous>, transform_indices = @transform_4, window_bounds = array<i64: 1, 64>}, {pipeline_mode = #tpu.pipeline_mode<synchronous>, transform_indices = @transform_5, window_bounds = array<i64: 64, 128>}, {pipeline_mode = #tpu.pipeline_mode<synchronous>, transform_indices = @transform_6, window_bounds = array<i64: 1, 128>}, {transform_indices = @transform_7, window_bounds = array<i64: 8, 128>}]} {
    %c0 = arith.constant 0 : index
    %c0_0 = arith.constant 0 : index
    %0 = vector.load %arg2[%c0, %c0_0] : memref<32x4xf32, #tpu.memory_space<vmem>>, vector<32x4xf32>
    %c0_1 = arith.constant 0 : index
    %c0_2 = arith.constant 0 : index
    %1 = vector.load %arg3[%c0_1, %c0_2] : memref<32x1xf32, #tpu.memory_space<vmem>>, vector<32x1xf32>
    %2 = vector.shape_cast %1 : vector<32x1xf32> to vector<1x32x1xf32>
    %c0_3 = arith.constant 0 : index
    %c0_4 = arith.constant 0 : index
    %3 = vector.load %arg1[%c0_3, %c0_4] : memref<8x1024xf32, #tpu.memory_space<vmem>>, vector<8x128xf32>
    %4 = vector.shape_cast %3 : vector<8x128xf32> to vector<8x1x128xf32>
    %5 = vector.extract_strided_slice %0 {offsets = [0, 0], sizes = [32, 1], strides = [1, 1]} : vector<32x4xf32> to vector<32x1xf32>
    %6 = vector.shape_cast %5 : vector<32x1xf32> to vector<1x32x1xf32>
    %7 = vector.broadcast %4 : vector<8x1x128xf32> to vector<8x32x128xf32>
    %8 = vector.broadcast %6 : vector<1x32x1xf32> to vector<8x32x128xf32>
    %9 = arith.mulf %7, %8 : vector<8x32x128xf32>
    %10 = vector.broadcast %2 : vector<1x32x1xf32> to vector<8x32x128xf32>
    %11 = arith.addf %10, %9 : vector<8x32x128xf32>
    %c0_5 = arith.constant 0 : index
    %c256 = arith.constant 256 : index
    %12 = vector.load %arg1[%c0_5, %c256] : memref<8x1024xf32, #tpu.memory_space<vmem>>, vector<8x128xf32>
    %13 = vector.shape_cast %12 : vector<8x128xf32> to vector<8x1x128xf32>
    %14 = vector.extract_strided_slice %0 {offsets = [0, 1], sizes = [32, 1], strides = [1, 1]} : vector<32x4xf32> to vector<32x1xf32>
    %15 = vector.shape_cast %14 : vector<32x1xf32> to vector<1x32x1xf32>
    %16 = vector.broadcast %13 : vector<8x1x128xf32> to vector<8x32x128xf32>
    %17 = vector.broadcast %15 : vector<1x32x1xf32> to vector<8x32x128xf32>
    %18 = arith.mulf %16, %17 : vector<8x32x128xf32>
    %19 = arith.addf %11, %18 : vector<8x32x128xf32>
    %c0_6 = arith.constant 0 : index
    %c512 = arith.constant 512 : index
    %20 = vector.load %arg1[%c0_6, %c512] : memref<8x1024xf32, #tpu.memory_space<vmem>>, vector<8x128xf32>
    %21 = vector.shape_cast %20 : vector<8x128xf32> to vector<8x1x128xf32>
    %22 = vector.extract_strided_slice %0 {offsets = [0, 2], sizes = [32, 1], strides = [1, 1]} : vector<32x4xf32> to vector<32x1xf32>
    %23 = vector.shape_cast %22 : vector<32x1xf32> to vector<1x32x1xf32>
    %24 = vector.broadcast %21 : vector<8x1x128xf32> to vector<8x32x128xf32>
    %25 = vector.broadcast %23 : vector<1x32x1xf32> to vector<8x32x128xf32>
    %26 = arith.mulf %24, %25 : vector<8x32x128xf32>
    %27 = arith.addf %19, %26 : vector<8x32x128xf32>
    %c0_7 = arith.constant 0 : index
    %c768 = arith.constant 768 : index
    %28 = vector.load %arg1[%c0_7, %c768] : memref<8x1024xf32, #tpu.memory_space<vmem>>, vector<8x128xf32>
    %29 = vector.shape_cast %28 : vector<8x128xf32> to vector<8x1x128xf32>
    %30 = vector.extract_strided_slice %0 {offsets = [0, 3], sizes = [32, 1], strides = [1, 1]} : vector<32x4xf32> to vector<32x1xf32>
    %31 = vector.shape_cast %30 : vector<32x1xf32> to vector<1x32x1xf32>
    %32 = vector.broadcast %29 : vector<8x1x128xf32> to vector<8x32x128xf32>
    %33 = vector.broadcast %31 : vector<1x32x1xf32> to vector<8x32x128xf32>
    %34 = arith.mulf %32, %33 : vector<8x32x128xf32>
    %35 = arith.addf %27, %34 : vector<8x32x128xf32>
    %cst = arith.constant 0.000000e+00 : f32
    %36 = vector.broadcast %cst : f32 to vector<8x32x128xf32>
    %37 = arith.maximumf %35, %36 : vector<8x32x128xf32>
    %cst_8 = arith.constant dense<0.000000e+00> : vector<8x32xf32>
    %38 = vector.multi_reduction <add>, %37, %cst_8 [2] : vector<8x32x128xf32> to vector<8x32xf32>
    %c0_9 = arith.constant 0 : index
    %c128 = arith.constant 128 : index
    %39 = vector.load %arg1[%c0_9, %c128] : memref<8x1024xf32, #tpu.memory_space<vmem>>, vector<8x128xf32>
    %40 = vector.shape_cast %39 : vector<8x128xf32> to vector<8x1x128xf32>
    %41 = vector.extract_strided_slice %0 {offsets = [0, 0], sizes = [32, 1], strides = [1, 1]} : vector<32x4xf32> to vector<32x1xf32>
    %42 = vector.shape_cast %41 : vector<32x1xf32> to vector<1x32x1xf32>
    %43 = vector.broadcast %40 : vector<8x1x128xf32> to vector<8x32x128xf32>
    %44 = vector.broadcast %42 : vector<1x32x1xf32> to vector<8x32x128xf32>
    %45 = arith.mulf %43, %44 : vector<8x32x128xf32>
    %46 = vector.broadcast %2 : vector<1x32x1xf32> to vector<8x32x128xf32>
    %47 = arith.addf %46, %45 : vector<8x32x128xf32>
    %c0_10 = arith.constant 0 : index
    %c384 = arith.constant 384 : index
    %48 = vector.load %arg1[%c0_10, %c384] : memref<8x1024xf32, #tpu.memory_space<vmem>>, vector<8x128xf32>
    %49 = vector.shape_cast %48 : vector<8x128xf32> to vector<8x1x128xf32>
    %50 = vector.extract_strided_slice %0 {offsets = [0, 1], sizes = [32, 1], strides = [1, 1]} : vector<32x4xf32> to vector<32x1xf32>
    %51 = vector.shape_cast %50 : vector<32x1xf32> to vector<1x32x1xf32>
    %52 = vector.broadcast %49 : vector<8x1x128xf32> to vector<8x32x128xf32>
    %53 = vector.broadcast %51 : vector<1x32x1xf32> to vector<8x32x128xf32>
    %54 = arith.mulf %52, %53 : vector<8x32x128xf32>
    %55 = arith.addf %47, %54 : vector<8x32x128xf32>
    %c0_11 = arith.constant 0 : index
    %c640 = arith.constant 640 : index
    %56 = vector.load %arg1[%c0_11, %c640] : memref<8x1024xf32, #tpu.memory_space<vmem>>, vector<8x128xf32>
    %57 = vector.shape_cast %56 : vector<8x128xf32> to vector<8x1x128xf32>
    %58 = vector.extract_strided_slice %0 {offsets = [0, 2], sizes = [32, 1], strides = [1, 1]} : vector<32x4xf32> to vector<32x1xf32>
    %59 = vector.shape_cast %58 : vector<32x1xf32> to vector<1x32x1xf32>
    %60 = vector.broadcast %57 : vector<8x1x128xf32> to vector<8x32x128xf32>
    %61 = vector.broadcast %59 : vector<1x32x1xf32> to vector<8x32x128xf32>
    %62 = arith.mulf %60, %61 : vector<8x32x128xf32>
    %63 = arith.addf %55, %62 : vector<8x32x128xf32>
    %c0_12 = arith.constant 0 : index
    %c896 = arith.constant 896 : index
    %64 = vector.load %arg1[%c0_12, %c896] : memref<8x1024xf32, #tpu.memory_space<vmem>>, vector<8x128xf32>
    %65 = vector.shape_cast %64 : vector<8x128xf32> to vector<8x1x128xf32>
    %66 = vector.extract_strided_slice %0 {offsets = [0, 3], sizes = [32, 1], strides = [1, 1]} : vector<32x4xf32> to vector<32x1xf32>
    %67 = vector.shape_cast %66 : vector<32x1xf32> to vector<1x32x1xf32>
    %68 = vector.broadcast %65 : vector<8x1x128xf32> to vector<8x32x128xf32>
    %69 = vector.broadcast %67 : vector<1x32x1xf32> to vector<8x32x128xf32>
    %70 = arith.mulf %68, %69 : vector<8x32x128xf32>
    %71 = arith.addf %63, %70 : vector<8x32x128xf32>
    %cst_13 = arith.constant 0.000000e+00 : f32
    %72 = vector.broadcast %cst_13 : f32 to vector<8x32x128xf32>
    %73 = arith.maximumf %71, %72 : vector<8x32x128xf32>
    %cst_14 = arith.constant dense<0.000000e+00> : vector<8x32xf32>
    %74 = vector.multi_reduction <add>, %73, %cst_14 [2] : vector<8x32x128xf32> to vector<8x32xf32>
    %75 = arith.addf %38, %74 : vector<8x32xf32>
    %c0_15 = arith.constant 0 : index
    %c0_16 = arith.constant 0 : index
    %76 = vector.load %arg4[%c0_15, %c0_16] : memref<32x64xf32, #tpu.memory_space<vmem>>, vector<32x64xf32>
    %cst_17 = arith.constant dense<0.000000e+00> : vector<8x64xf32>
    %77 = tpu.matmul %75, %76, %cst_17 {dimension_numbers = #tpu.dot_dimension_numbers<[1], [0], [0], [1], [0, 0, 1, 1], [], []>} : vector<8x32xf32>, vector<32x64xf32>, vector<8x64xf32> -> vector<8x64xf32>
    %c0_18 = arith.constant 0 : index
    %c0_19 = arith.constant 0 : index
    %78 = vector.load %arg5[%c0_18, %c0_19] : memref<1x64xf32, #tpu.memory_space<vmem>>, vector<1x64xf32>
    %79 = vector.broadcast %78 : vector<1x64xf32> to vector<8x64xf32>
    %80 = arith.addf %77, %79 : vector<8x64xf32>
    %81 = arith.mulf %80, %80 : vector<8x64xf32>
    %82 = arith.mulf %80, %81 : vector<8x64xf32>
    %cst_20 = arith.constant 4.471500e-02 : f32
    %83 = vector.broadcast %cst_20 : f32 to vector<8x64xf32>
    %84 = arith.mulf %83, %82 : vector<8x64xf32>
    %85 = arith.addf %80, %84 : vector<8x64xf32>
    %cst_21 = arith.constant 0.797884583 : f32
    %86 = vector.broadcast %cst_21 : f32 to vector<8x64xf32>
    %87 = arith.mulf %86, %85 : vector<8x64xf32>
    %88 = math.tanh %87 : vector<8x64xf32>
    %cst_22 = arith.constant 1.000000e+00 : f32
    %89 = vector.broadcast %cst_22 : f32 to vector<8x64xf32>
    %90 = arith.addf %89, %88 : vector<8x64xf32>
    %cst_23 = arith.constant 5.000000e-01 : f32
    %91 = vector.broadcast %cst_23 : f32 to vector<8x64xf32>
    %92 = arith.mulf %91, %90 : vector<8x64xf32>
    %93 = arith.mulf %80, %92 : vector<8x64xf32>
    %c0_24 = arith.constant 0 : index
    %c0_25 = arith.constant 0 : index
    %94 = vector.load %arg6[%c0_24, %c0_25] : memref<64x128xf32, #tpu.memory_space<vmem>>, vector<64x128xf32>
    %cst_26 = arith.constant dense<0.000000e+00> : vector<8x128xf32>
    %95 = tpu.matmul %93, %94, %cst_26 {dimension_numbers = #tpu.dot_dimension_numbers<[1], [0], [0], [1], [0, 0, 1, 1], [], []>} : vector<8x64xf32>, vector<64x128xf32>, vector<8x128xf32> -> vector<8x128xf32>
    %c0_27 = arith.constant 0 : index
    %c0_28 = arith.constant 0 : index
    %96 = vector.load %arg7[%c0_27, %c0_28] : memref<1x128xf32, #tpu.memory_space<vmem>>, vector<1x128xf32>
    %97 = vector.broadcast %96 : vector<1x128xf32> to vector<8x128xf32>
    %98 = arith.addf %95, %97 : vector<8x128xf32>
    %c0_29 = arith.constant 0 : index
    %c0_30 = arith.constant 0 : index
    %99 = vector.load %arg8[%c0_29, %c0_30] : memref<8x128xf32, #tpu.memory_space<vmem>>, vector<8x128xf32>
    tpu.vector_store %arg8[%c0_29, %c0_30], %98 {strides = array<i32>} : memref<8x128xf32, #tpu.memory_space<vmem>>, vector<8x128xf32>,
    return
  }
  func.func @transform_0(%arg0: i32) -> (i32, i32) {
    %c0_i32 = arith.constant 0 : i32
    %c0_i32_0 = arith.constant 0 : i32
    return %arg0, %c0_i32 : i32, i32
  }
  func.func @transform_1(%arg0: i32) -> (i32, i32) {
    %c0_i32 = arith.constant 0 : i32
    %c0_i32_0 = arith.constant 0 : i32
    %c0_i32_1 = arith.constant 0 : i32
    return %c0_i32, %c0_i32_0 : i32, i32
  }
  func.func @transform_2(%arg0: i32) -> (i32, i32) {
    %c0_i32 = arith.constant 0 : i32
    %c0_i32_0 = arith.constant 0 : i32
    %c0_i32_1 = arith.constant 0 : i32
    return %c0_i32, %c0_i32_0 : i32, i32
  }
  func.func @transform_3(%arg0: i32) -> (i32, i32) {
    %c0_i32 = arith.constant 0 : i32
    %c0_i32_0 = arith.constant 0 : i32
    %c0_i32_1 = arith.constant 0 : i32
    return %c0_i32, %c0_i32_0 : i32, i32
  }
  func.func @transform_4(%arg0: i32) -> (i32, i32) {
    %c0_i32 = arith.constant 0 : i32
    %c0_i32_0 = arith.constant 0 : i32
    %c0_i32_1 = arith.constant 0 : i32
    return %c0_i32, %c0_i32_0 : i32, i32
  }
  func.func @transform_5(%arg0: i32) -> (i32, i32) {
    %c0_i32 = arith.constant 0 : i32
    %c0_i32_0 = arith.constant 0 : i32
    %c0_i32_1 = arith.constant 0 : i32
    return %c0_i32, %c0_i32_0 : i32, i32
  }
  func.func @transform_6(%arg0: i32) -> (i32, i32) {
    %c0_i32 = arith.constant 0 : i32
    %c0_i32_0 = arith.constant 0 : i32
    %c0_i32_1 = arith.constant 0 : i32
    return %c0_i32, %c0_i32_0 : i32, i32
  }
  func.func @transform_7(%arg0: i32) -> (i32, i32) {
    %c0_i32 = arith.constant 0 : i32
    %c0_i32_0 = arith.constant 0 : i32
    return %arg0, %c0_i32 : i32, i32
  }
}

</mosaic_0001>

<llo_original>
// kernel: tpu_custom_call.1
$region0: #{tpu_custom_call.1}
  #allocation0 [shape = 'u32[]', space=smem, size = 0x4, offset = 0x4, fixed_abs, tag = 'smem constant byte address 0x4 - core index']
  #allocation1 [shape = 'u32[144,128]{1,0:T(1,128)}', space=vmem, size = 0x12000, scoped, tag = 'internal scratch']
  %s0 = inlined_call_operand.vmem [shape: f32[8,1024], index: 0, kind: input, shape index: {}]
  %s1 = inlined_call_operand.vmem [shape: f32[32,4], index: 1, kind: input, shape index: {}]
  %s2 = inlined_call_operand.vmem [shape: f32[32,1], index: 2, kind: input, shape index: {}]
  %s3 = inlined_call_operand.hbm [shape: f32[32,64], index: 3, kind: input, shape index: {}]
  %s4 = inlined_call_operand.vmem [shape: f32[1,64], index: 4, kind: input, shape index: {}]
  %s5 = inlined_call_operand.hbm [shape: f32[64,128], index: 5, kind: input, shape index: {}]
  %s6 = inlined_call_operand.vmem [shape: f32[1,128], index: 6, kind: input, shape index: {}]
  %s7 = inlined_call_operand.hbm [shape: f32[8,128], index: 7, kind: output, shape index: {}]
  %s8 = sld [smem:[#allocation0]]
  $region46: #{tpu_custom_call.1} parent=0
    _
  %s10 = ssub.s32 1, %s8
  %s11 = scalar_select 0, %s10, %s8
  $region1: #{tpu_custom_call.1} parent=0
    #allocation2 [shape = 'u8[16384]{0}', space=vmem, size = 0x4000, scoped, tag = 'input window, operand 3, single buffered']
    #allocation3 [shape = 's32[1]{0}', space=sflag, size = 0x4, scoped, tag = 'scoped memory for tpu_custom_call.1']
    #allocation4 [shape = 's32[1]{0}', space=sflag, size = 0x4, scoped, tag = 'scoped memory for tpu_custom_call.1']
    #allocation5 [shape = 'u8[32768]{0}', space=vmem, size = 0x8000, scoped, tag = 'input window, operand 5, single buffered']
    #allocation6 [shape = 's32[1]{0}', space=sflag, size = 0x4, scoped, tag = 'scoped memory for tpu_custom_call.1']
    #allocation7 [shape = 'u8[4096]{0}', space=vmem, size = 0x1000, scoped, tag = 'output window, operand 0, single buffered']
    %12 = vsyncpa [#allocation3], 0
    %13 = vsyncpa [#allocation6], 0
    %14 = vsyncpa [#allocation4], 0
    // Predicated region
    $region2: #{tpu_custom_call.1} parent=1 // pred_check
      _
    $region3: #{tpu_custom_call.1} parent=1 // pred_check_branch
      %16 = sbr.rel (0) target = $region5
    $region4: #{tpu_custom_call.1} parent=1 // pred_region
      _
    $region5: #{tpu_custom_call.1} parent=1 // pred_fallthru
      _
    // Predicated region
    $region6: #{tpu_custom_call.1} parent=1 // pred_check
      _
    $region7: #{tpu_custom_call.1} parent=1 // pred_check_branch
      %18 = sbr.rel (0) target = $region9
    $region8: #{tpu_custom_call.1} parent=1 // pred_region
      _
    $region9: #{tpu_custom_call.1} parent=1 // pred_fallthru
      _
    // Predicated region
    $region10: #{tpu_custom_call.1} parent=1 // pred_check
      _
    $region11: #{tpu_custom_call.1} parent=1 // pred_check_branch
      %20 = sbr.rel (0) target = $region13
    $region12: #{tpu_custom_call.1} parent=1 // pred_region
      _
    $region13: #{tpu_custom_call.1} parent=1 // pred_fallthru
      _
    // Predicated region
    $region14: #{tpu_custom_call.1} parent=1 // pred_check
      _
    $region15: #{tpu_custom_call.1} parent=1 // pred_check_branch
      %22 = sbr.rel (0) target = $region17
    $region16: #{tpu_custom_call.1} parent=1 // pred_region
      %s24 = ssub.s32 512, 512
      %25 = vsyncadd [#allocation3], %s24
      %s26 = sshll.u32 [#allocation2], 4
      %s27 = int_to_ptr.vmem [resolvable:$true] %s26
      %32 = dma.hbm_to_vmem [thread:$0]  %s3, 512, %s27, [#allocation3], 128, 128, 8
    $region17: #{tpu_custom_call.1} parent=1 // pred_fallthru
      _
    // Predicated region
    $region18: #{tpu_custom_call.1} parent=1 // pred_check
      _
    $region19: #{tpu_custom_call.1} parent=1 // pred_check_branch
      %34 = sbr.rel (0) target = $region21
    $region20: #{tpu_custom_call.1} parent=1 // pred_region
      _
    $region21: #{tpu_custom_call.1} parent=1 // pred_fallthru
      _
    // Predicated region
    $region22: #{tpu_custom_call.1} parent=1 // pred_check
      _
    $region23: #{tpu_custom_call.1} parent=1 // pred_check_branch
      %36 = sbr.rel (0) target = $region25
    $region24: #{tpu_custom_call.1} parent=1 // pred_region
      %s38 = ssub.s32 1024, 1024
      %39 = vsyncadd [#allocation6], %s38
      %s40 = sshll.u32 [#allocation5], 4
      %s41 = int_to_ptr.vmem [resolvable:$true] %s40
      %46 = dma.hbm_to_vmem [thread:$0]  %s5, 1024, %s41, [#allocation6], 128, 128, 8
    $region25: #{tpu_custom_call.1} parent=1 // pred_fallthru
      _
    // Predicated region
    $region26: #{tpu_custom_call.1} parent=1 // pred_check
      _
    $region27: #{tpu_custom_call.1} parent=1 // pred_check_branch
      %48 = sbr.rel (0) target = $region29
    $region28: #{tpu_custom_call.1} parent=1 // pred_region
      _
    $region29: #{tpu_custom_call.1} parent=1 // pred_fallthru
      _
    // Predicated region
    $region30: #{tpu_custom_call.1} parent=1 // pred_check
      _
    $region31: #{tpu_custom_call.1} parent=1 // pred_check_branch
      %50 = sbr.rel (0) target = $region33
    $region32: #{tpu_custom_call.1} parent=1 // pred_region
      %51 = dma.done [#allocation3], 512
    $region33: #{tpu_custom_call.1} parent=1 // pred_fallthru
      _
    // Predicated region
    $region34: #{tpu_custom_call.1} parent=1 // pred_check
      _
    $region35: #{tpu_custom_call.1} parent=1 // pred_check_branch
      %53 = sbr.rel (0) target = $region37
    $region36: #{tpu_custom_call.1} parent=1 // pred_region
      %54 = dma.done [#allocation6], 1024
    $region37: #{tpu_custom_call.1} parent=1 // pred_fallthru
      _
    %v55 = vld [vmem:[%s1] sm:$0xff]
    %v56 = vld [vmem:[%s1 + $0x8] sm:$0xff]
    %v57 = vld [vmem:[%s1 + $0x10] sm:$0xff]
    %v58 = vld [vmem:[%s1 + $0x18] sm:$0xff]
    %v59 = vld [vmem:[%s2] sm:$0xff]
    %v60 = vld [vmem:[%s2 + $0x8] sm:$0xff]
    %v61 = vld [vmem:[%s2 + $0x10] sm:$0xff]
    %v62 = vld [vmem:[%s2 + $0x18] sm:$0xff]
    %v63 = vld [vmem:[%s0] sm:$0xff]
    %v65 = vcombine.high %v63, %v63
    %v67 = vunpack.c.l.s4 1966171168
    %v68 = vunpack.c.0.s8 %v67
    %v69 = vlaneseq
    %v70 = vshrl.u32 %v69, 7
    %v71 = vsub.s32 %v68, %v70
    %v72 = vrot.slane %v63, %v71
    %v74 = vunpack.c.l.s4 1966171168
    %v75 = vunpack.c.0.s8 %v74
    %v76 = vlaneseq
    %v77 = vshrl.u32 %v76, 7
    %v78 = vsub.s32 %v75, %v77
    %v79 = vrot.slane %v65, %v78
    %v80 = vcombine.high %v72, %v72
    %v81 = vcombine.high %v79, %v79
    %v83 = vunpack.c.l.s4 1966171168
    %v84 = vunpack.c.0.s8 %v83
    %v85 = vlaneseq
    %v86 = vshrl.u32 %v85, 7
    %v87 = vsub.s32 %v84, %v86
    %v88 = vrot.slane %v72, %v87
    %v90 = vunpack.c.l.s4 1966171168
    %v91 = vunpack.c.0.s8 %v90
    %v92 = vlaneseq
    %v93 = vshrl.u32 %v92, 7
    %v94 = vsub.s32 %v91, %v93
    %v95 = vrot.slane %v79, %v94
    %v97 = vunpack.c.l.s4 1966171168
    %v98 = vunpack.c.0.s8 %v97
    %v99 = vlaneseq
    %v100 = vshrl.u32 %v99, 7
    %v101 = vsub.s32 %v98, %v100
    %v102 = vrot.slane %v80, %v101
    %v104 = vunpack.c.l.s4 1966171168
    %v105 = vunpack.c.0.s8 %v104
    %v106 = vlaneseq
    %v107 = vshrl.u32 %v106, 7
    %v108 = vsub.s32 %v105, %v107
    %v109 = vrot.slane %v81, %v108
    %v110 = vcombine.high %v88, %v88
    %v111 = vcombine.high %v95, %v95
    %v112 = vcombine.high %v102, %v102
    %v113 = vcombine.high %v109, %v109
    %v114 = vlaneseq
    %v115 = vshrl.u32 %v114, 7
    %v116 = vsub.s32 0, %v115
    %v117 = vrot.slane %v88, %v116
    %v118 = vlaneseq
    %v119 = vshrl.u32 %v118, 7
    %v120 = vsub.s32 0, %v119
    %v121 = vrot.slane %v102, %v120
    %v122 = vlaneseq
    %v123 = vshrl.u32 %v122, 7
    %v124 = vsub.s32 0, %v123
    %v125 = vrot.slane %v110, %v124
    %v126 = vlaneseq
    %v127 = vshrl.u32 %v126, 7
    %v128 = vsub.s32 0, %v127
    %v129 = vrot.slane %v112, %v128
    %v130 = vlaneseq
    %v131 = vshrl.u32 %v130, 7
    %v132 = vsub.s32 0, %v131
    %v133 = vrot.slane %v95, %v132
    %v134 = vlaneseq
    %v135 = vshrl.u32 %v134, 7
    %v136 = vsub.s32 0, %v135
    %v137 = vrot.slane %v109, %v136
    %v138 = vlaneseq
    %v139 = vshrl.u32 %v138, 7
    %v140 = vsub.s32 0, %v139
    %v141 = vrot.slane %v111, %v140
    %v142 = vlaneseq
    %v143 = vshrl.u32 %v142, 7
    %v144 = vsub.s32 0, %v143
    %v145 = vrot.slane %v113, %v144
    %155 = vset.pattern.permute.xlu0 0
    %156 = vperm.xlu0 %155, %v55
    %v157 = vpop.permute.xlu0 %156
    %160 = vset.pattern.permute.xlu0 0
    %161 = vperm.xlu0 %160, %v56
    %v162 = vpop.permute.xlu0 %161
    %165 = vset.pattern.permute.xlu0 0
    %166 = vperm.xlu0 %165, %v57
    %v167 = vpop.permute.xlu0 %166
    %170 = vset.pattern.permute.xlu0 0
    %171 = vperm.xlu0 %170, %v58
    %v172 = vpop.permute.xlu0 %171
    %v174 = vmul.f32 %v117, %v157
    %v175 = vmul.f32 %v117, %v162
    %v176 = vmul.f32 %v117, %v167
    %v177 = vmul.f32 %v117, %v172
    %v178 = vmul.f32 %v121, %v157
    %v179 = vmul.f32 %v121, %v162
    %v180 = vmul.f32 %v121, %v167
    %v181 = vmul.f32 %v121, %v172
    %v182 = vmul.f32 %v125, %v157
    %v183 = vmul.f32 %v125, %v162
    %v184 = vmul.f32 %v125, %v167
    %v185 = vmul.f32 %v125, %v172
    %v186 = vmul.f32 %v129, %v157
    %v187 = vmul.f32 %v129, %v162
    %v188 = vmul.f32 %v129, %v167
    %v189 = vmul.f32 %v129, %v172
    %v190 = vmul.f32 %v133, %v157
    %v191 = vmul.f32 %v133, %v162
    %v192 = vmul.f32 %v133, %v167
    %v193 = vmul.f32 %v133, %v172
    %v194 = vmul.f32 %v137, %v157
    %v195 = vmul.f32 %v137, %v162
    %v196 = vmul.f32 %v137, %v167
    %v197 = vmul.f32 %v137, %v172
    %v198 = vmul.f32 %v141, %v157
    %v199 = vmul.f32 %v141, %v162
    %v200 = vmul.f32 %v141, %v167
    %v201 = vmul.f32 %v141, %v172
    %v202 = vmul.f32 %v145, %v157
    %v203 = vmul.f32 %v145, %v162
    %v204 = vmul.f32 %v145, %v167
    %v205 = vmul.f32 %v145, %v172
    %207 = vset.pattern.permute.xlu0 0
    %208 = vperm.xlu0 %207, %v59
    %v209 = vpop.permute.xlu0 %208
    %212 = vset.pattern.permute.xlu0 0
    %213 = vperm.xlu0 %212, %v60
    %v214 = vpop.permute.xlu0 %213
    %217 = vset.pattern.permute.xlu0 0
    %218 = vperm.xlu0 %217, %v61
    %v219 = vpop.permute.xlu0 %218
    %222 = vset.pattern.permute.xlu0 0
    %223 = vperm.xlu0 %222, %v62
    %v224 = vpop.permute.xlu0 %223
    %v226 = vadd.f32 %v209, %v174
    %v227 = vadd.f32 %v214, %v175
    %v228 = vadd.f32 %v219, %v176
    %v229 = vadd.f32 %v224, %v177
    %v230 = vadd.f32 %v209, %v178
    %v231 = vadd.f32 %v214, %v179
    %v232 = vadd.f32 %v219, %v180
    %v233 = vadd.f32 %v224, %v181
    %v234 = vadd.f32 %v209, %v182
    %v235 = vadd.f32 %v214, %v183
    %v236 = vadd.f32 %v219, %v184
    %v237 = vadd.f32 %v224, %v185
    %v238 = vadd.f32 %v209, %v186
    %v239 = vadd.f32 %v214, %v187
    %v240 = vadd.f32 %v219, %v188
    %v241 = vadd.f32 %v224, %v189
    %v242 = vadd.f32 %v209, %v190
    %v243 = vadd.f32 %v214, %v191
    %v244 = vadd.f32 %v219, %v192
    %v245 = vadd.f32 %v224, %v193
    %v246 = vadd.f32 %v209, %v194
    %v247 = vadd.f32 %v214, %v195
    %v248 = vadd.f32 %v219, %v196
    %v249 = vadd.f32 %v224, %v197
    %v250 = vadd.f32 %v209, %v198
    %v251 = vadd.f32 %v214, %v199
    %v252 = vadd.f32 %v219, %v200
    %v253 = vadd.f32 %v224, %v201
    %v254 = vadd.f32 %v209, %v202
    %v255 = vadd.f32 %v214, %v203
    %v256 = vadd.f32 %v219, %v204
    %v257 = vadd.f32 %v224, %v205
    %v258 = vld [vmem:[%s0 + $0x10] sm:$0xff]
    %v260 = vcombine.high %v258, %v258
    %v262 = vunpack.c.l.s4 1966171168
    %v263 = vunpack.c.0.s8 %v262
    %v264 = vlaneseq
    %v265 = vshrl.u32 %v264, 7
    %v266 = vsub.s32 %v263, %v265
    %v267 = vrot.slane %v258, %v266
    %v269 = vunpack.c.l.s4 1966171168
    %v270 = vunpack.c.0.s8 %v269
    %v271 = vlaneseq
    %v272 = vshrl.u32 %v271, 7
    %v273 = vsub.s32 %v270, %v272
    %v274 = vrot.slane %v260, %v273
    %v275 = vcombine.high %v267, %v267
    %v276 = vcombine.high %v274, %v274
    %v278 = vunpack.c.l.s4 1966171168
    %v279 = vunpack.c.0.s8 %v278
    %v280 = vlaneseq
    %v281 = vshrl.u32 %v280, 7
    %v282 = vsub.s32 %v279, %v281
    %v283 = vrot.slane %v267, %v282
    %v285 = vunpack.c.l.s4 1966171168
    %v286 = vunpack.c.0.s8 %v285
    %v287 = vlaneseq
    %v288 = vshrl.u32 %v287, 7
    %v289 = vsub.s32 %v286, %v288
    %v290 = vrot.slane %v274, %v289
    %v292 = vunpack.c.l.s4 1966171168
    %v293 = vunpack.c.0.s8 %v292
    %v294 = vlaneseq
    %v295 = vshrl.u32 %v294, 7
    %v296 = vsub.s32 %v293, %v295
    %v297 = vrot.slane %v275, %v296
    %v299 = vunpack.c.l.s4 1966171168
    %v300 = vunpack.c.0.s8 %v299
    %v301 = vlaneseq
    %v302 = vshrl.u32 %v301, 7
    %v303 = vsub.s32 %v300, %v302
    %v304 = vrot.slane %v276, %v303
    %v305 = vcombine.high %v283, %v283
    %v306 = vcombine.high %v290, %v290
    %v307 = vcombine.high %v297, %v297
    %v308 = vcombine.high %v304, %v304
    %v309 = vlaneseq
    %v310 = vshrl.u32 %v309, 7
    %v311 = vsub.s32 0, %v310
    %v312 = vrot.slane %v283, %v311
    %v313 = vlaneseq
    %v314 = vshrl.u32 %v313, 7
    %v315 = vsub.s32 0, %v314
    %v316 = vrot.slane %v297, %v315
    %v317 = vlaneseq
    %v318 = vshrl.u32 %v317, 7
    %v319 = vsub.s32 0, %v318
    %v320 = vrot.slane %v305, %v319
    %v321 = vlaneseq
    %v322 = vshrl.u32 %v321, 7
    %v323 = vsub.s32 0, %v322
    %v324 = vrot.slane %v307, %v323
    %v325 = vlaneseq
    %v326 = vshrl.u32 %v325, 7
    %v327 = vsub.s32 0, %v326
    %v328 = vrot.slane %v290, %v327
    %v329 = vlaneseq
    %v330 = vshrl.u32 %v329, 7
    %v331 = vsub.s32 0, %v330
    %v332 = vrot.slane %v304, %v331
    %v333 = vlaneseq
    %v334 = vshrl.u32 %v333, 7
    %v335 = vsub.s32 0, %v334
    %v336 = vrot.slane %v306, %v335
    %v337 = vlaneseq
    %v338 = vshrl.u32 %v337, 7
    %v339 = vsub.s32 0, %v338
    %v340 = vrot.slane %v308, %v339
    %349 = vset.pattern.permute.xlu0 1
    %350 = vperm.xlu0 %349, %v55
    %v351 = vpop.permute.xlu0 %350
    %353 = vset.pattern.permute.xlu0 1
    %354 = vperm.xlu0 %353, %v56
    %v355 = vpop.permute.xlu0 %354
    %357 = vset.pattern.permute.xlu0 1
    %358 = vperm.xlu0 %357, %v57
    %v359 = vpop.permute.xlu0 %358
    %361 = vset.pattern.permute.xlu0 1
    %362 = vperm.xlu0 %361, %v58
    %v363 = vpop.permute.xlu0 %362
    %v365 = vmul.f32 %v312, %v351
    %v366 = vmul.f32 %v312, %v355
    %v367 = vmul.f32 %v312, %v359
    %v368 = vmul.f32 %v312, %v363
    %v369 = vmul.f32 %v316, %v351
    %v370 = vmul.f32 %v316, %v355
    %v371 = vmul.f32 %v316, %v359
    %v372 = vmul.f32 %v316, %v363
    %v373 = vmul.f32 %v320, %v351
    %v374 = vmul.f32 %v320, %v355
    %v375 = vmul.f32 %v320, %v359
    %v376 = vmul.f32 %v320, %v363
    %v377 = vmul.f32 %v324, %v351
    %v378 = vmul.f32 %v324, %v355
    %v379 = vmul.f32 %v324, %v359
    %v380 = vmul.f32 %v324, %v363
    %v381 = vmul.f32 %v328, %v351
    %v382 = vmul.f32 %v328, %v355
    %v383 = vmul.f32 %v328, %v359
    %v384 = vmul.f32 %v328, %v363
    %v385 = vmul.f32 %v332, %v351
    %v386 = vmul.f32 %v332, %v355
    %v387 = vmul.f32 %v332, %v359
    %v388 = vmul.f32 %v332, %v363
    %v389 = vmul.f32 %v336, %v351
    %v390 = vmul.f32 %v336, %v355
    %v391 = vmul.f32 %v336, %v359
    %v392 = vmul.f32 %v336, %v363
    %v393 = vmul.f32 %v340, %v351
    %v394 = vmul.f32 %v340, %v355
    %v395 = vmul.f32 %v340, %v359
    %v396 = vmul.f32 %v340, %v363
    %v397 = vadd.f32 %v226, %v365
    %v398 = vadd.f32 %v227, %v366
    %v399 = vadd.f32 %v228, %v367
    %v400 = vadd.f32 %v229, %v368
    %v401 = vadd.f32 %v230, %v369
    %v402 = vadd.f32 %v231, %v370
    %v403 = vadd.f32 %v232, %v371
    %v404 = vadd.f32 %v233, %v372
    %v405 = vadd.f32 %v234, %v373
    %v406 = vadd.f32 %v235, %v374
    %v407 = vadd.f32 %v236, %v375
    %v408 = vadd.f32 %v237, %v376
    %v409 = vadd.f32 %v238, %v377
    %v410 = vadd.f32 %v239, %v378
    %v411 = vadd.f32 %v240, %v379
    %v412 = vadd.f32 %v241, %v380
    %v413 = vadd.f32 %v242, %v381
    %v414 = vadd.f32 %v243, %v382
    %v415 = vadd.f32 %v244, %v383
    %v416 = vadd.f32 %v245, %v384
    %v417 = vadd.f32 %v246, %v385
    %v418 = vadd.f32 %v247, %v386
    %v419 = vadd.f32 %v248, %v387
    %v420 = vadd.f32 %v249, %v388
    %v421 = vadd.f32 %v250, %v389
    %v422 = vadd.f32 %v251, %v390
    %v423 = vadd.f32 %v252, %v391
    %v424 = vadd.f32 %v253, %v392
    %v425 = vadd.f32 %v254, %v393
    %v426 = vadd.f32 %v255, %v394
    %v427 = vadd.f32 %v256, %v395
    %v428 = vadd.f32 %v257, %v396
    %v429 = vld [vmem:[%s0 + $0x20] sm:$0xff]
    %v431 = vcombine.high %v429, %v429
    %v433 = vunpack.c.l.s4 1966171168
    %v434 = vunpack.c.0.s8 %v433
    %v435 = vlaneseq
    %v436 = vshrl.u32 %v435, 7
    %v437 = vsub.s32 %v434, %v436
    %v438 = vrot.slane %v429, %v437
    %v440 = vunpack.c.l.s4 1966171168
    %v441 = vunpack.c.0.s8 %v440
    %v442 = vlaneseq
    %v443 = vshrl.u32 %v442, 7
    %v444 = vsub.s32 %v441, %v443
    %v445 = vrot.slane %v431, %v444
    %v446 = vcombine.high %v438, %v438
    %v447 = vcombine.high %v445, %v445
    %v449 = vunpack.c.l.s4 1966171168
    %v450 = vunpack.c.0.s8 %v449
    %v451 = vlaneseq
    %v452 = vshrl.u32 %v451, 7
    %v453 = vsub.s32 %v450, %v452
    %v454 = vrot.slane %v438, %v453
    %v456 = vunpack.c.l.s4 1966171168
    %v457 = vunpack.c.0.s8 %v456
    %v458 = vlaneseq
    %v459 = vshrl.u32 %v458, 7
    %v460 = vsub.s32 %v457, %v459
    %v461 = vrot.slane %v445, %v460
    %v463 = vunpack.c.l.s4 1966171168
    %v464 = vunpack.c.0.s8 %v463
    %v465 = vlaneseq
    %v466 = vshrl.u32 %v465, 7
    %v467 = vsub.s32 %v464, %v466
    %v468 = vrot.slane %v446, %v467
    %v470 = vunpack.c.l.s4 1966171168
    %v471 = vunpack.c.0.s8 %v470
    %v472 = vlaneseq
    %v473 = vshrl.u32 %v472, 7
    %v474 = vsub.s32 %v471, %v473
    %v475 = vrot.slane %v447, %v474
    %v476 = vcombine.high %v454, %v454
    %v477 = vcombine.high %v461, %v461
    %v478 = vcombine.high %v468, %v468
    %v479 = vcombine.high %v475, %v475
    %v480 = vlaneseq
    %v481 = vshrl.u32 %v480, 7
    %v482 = vsub.s32 0, %v481
    %v483 = vrot.slane %v454, %v482
    %v484 = vlaneseq
    %v485 = vshrl.u32 %v484, 7
    %v486 = vsub.s32 0, %v485
    %v487 = vrot.slane %v468, %v486
    %v488 = vlaneseq
    %v489 = vshrl.u32 %v488, 7
    %v490 = vsub.s32 0, %v489
    %v491 = vrot.slane %v476, %v490
    %v492 = vlaneseq
    %v493 = vshrl.u32 %v492, 7
    %v494 = vsub.s32 0, %v493
    %v495 = vrot.slane %v478, %v494
    %v496 = vlaneseq
    %v497 = vshrl.u32 %v496, 7
    %v498 = vsub.s32 0, %v497
    %v499 = vrot.slane %v461, %v498
    %v500 = vlaneseq
    %v501 = vshrl.u32 %v500, 7
    %v502 = vsub.s32 0, %v501
    %v503 = vrot.slane %v475, %v502
    %v504 = vlaneseq
    %v505 = vshrl.u32 %v504, 7
    %v506 = vsub.s32 0, %v505
    %v507 = vrot.slane %v477, %v506
    %v508 = vlaneseq
    %v509 = vshrl.u32 %v508, 7
    %v510 = vsub.s32 0, %v509
    %v511 = vrot.slane %v479, %v510
    %520 = vset.pattern.permute.xlu0 2
    %521 = vperm.xlu0 %520, %v55
    %v522 = vpop.permute.xlu0 %521
    %524 = vset.pattern.permute.xlu0 2
    %525 = vperm.xlu0 %524, %v56
    %v526 = vpop.permute.xlu0 %525
    %528 = vset.pattern.permute.xlu0 2
    %529 = vperm.xlu0 %528, %v57
    %v530 = vpop.permute.xlu0 %529
    %532 = vset.pattern.permute.xlu0 2
    %533 = vperm.xlu0 %532, %v58
    %v534 = vpop.permute.xlu0 %533
    %v536 = vmul.f32 %v483, %v522
    %v537 = vmul.f32 %v483, %v526
    %v538 = vmul.f32 %v483, %v530
    %v539 = vmul.f32 %v483, %v534
    %v540 = vmul.f32 %v487, %v522
    %v541 = vmul.f32 %v487, %v526
    %v542 = vmul.f32 %v487, %v530
    %v543 = vmul.f32 %v487, %v534
    %v544 = vmul.f32 %v491, %v522
    %v545 = vmul.f32 %v491, %v526
    %v546 = vmul.f32 %v491, %v530
    %v547 = vmul.f32 %v491, %v534
    %v548 = vmul.f32 %v495, %v522
    %v549 = vmul.f32 %v495, %v526
    %v550 = vmul.f32 %v495, %v530
    %v551 = vmul.f32 %v495, %v534
    %v552 = vmul.f32 %v499, %v522
    %v553 = vmul.f32 %v499, %v526
    %v554 = vmul.f32 %v499, %v530
    %v555 = vmul.f32 %v499, %v534
    %v556 = vmul.f32 %v503, %v522
    %v557 = vmul.f32 %v503, %v526
    %v558 = vmul.f32 %v503, %v530
    %v559 = vmul.f32 %v503, %v534
    %v560 = vmul.f32 %v507, %v522
    %v561 = vmul.f32 %v507, %v526
    %v562 = vmul.f32 %v507, %v530
    %v563 = vmul.f32 %v507, %v534
    %v564 = vmul.f32 %v511, %v522
    %v565 = vmul.f32 %v511, %v526
    %v566 = vmul.f32 %v511, %v530
    %v567 = vmul.f32 %v511, %v534
    %v568 = vadd.f32 %v397, %v536
    %v569 = vadd.f32 %v398, %v537
    %v570 = vadd.f32 %v399, %v538
    %v571 = vadd.f32 %v400, %v539
    %v572 = vadd.f32 %v401, %v540
    %v573 = vadd.f32 %v402, %v541
    %v574 = vadd.f32 %v403, %v542
    %v575 = vadd.f32 %v404, %v543
    %v576 = vadd.f32 %v405, %v544
    %v577 = vadd.f32 %v406, %v545
    %v578 = vadd.f32 %v407, %v546
    %v579 = vadd.f32 %v408, %v547
    %v580 = vadd.f32 %v409, %v548
    %v581 = vadd.f32 %v410, %v549
    %v582 = vadd.f32 %v411, %v550
    %v583 = vadd.f32 %v412, %v551
    %v584 = vadd.f32 %v413, %v552
    %v585 = vadd.f32 %v414, %v553
    %v586 = vadd.f32 %v415, %v554
    %v587 = vadd.f32 %v416, %v555
    %v588 = vadd.f32 %v417, %v556
    %v589 = vadd.f32 %v418, %v557
    %v590 = vadd.f32 %v419, %v558
    %v591 = vadd.f32 %v420, %v559
    %v592 = vadd.f32 %v421, %v560
    %v593 = vadd.f32 %v422, %v561
    %v594 = vadd.f32 %v423, %v562
    %v595 = vadd.f32 %v424, %v563
    %v596 = vadd.f32 %v425, %v564
    %v597 = vadd.f32 %v426, %v565
    %v598 = vadd.f32 %v427, %v566
    %v599 = vadd.f32 %v428, %v567
    %v600 = vld [vmem:[%s0 + $0x30] sm:$0xff]
    %v602 = vcombine.high %v600, %v600
    %v604 = vunpack.c.l.s4 1966171168
    %v605 = vunpack.c.0.s8 %v604
    %v606 = vlaneseq
    %v607 = vshrl.u32 %v606, 7
    %v608 = vsub.s32 %v605, %v607
    %v609 = vrot.slane %v600, %v608
    %v611 = vunpack.c.l.s4 1966171168
    %v612 = vunpack.c.0.s8 %v611
    %v613 = vlaneseq
    %v614 = vshrl.u32 %v613, 7
    %v615 = vsub.s32 %v612, %v614
    %v616 = vrot.slane %v602, %v615
    %v617 = vcombine.high %v609, %v609
    %v618 = vcombine.high %v616, %v616
    %v620 = vunpack.c.l.s4 1966171168
    %v621 = vunpack.c.0.s8 %v620
    %v622 = vlaneseq
    %v623 = vshrl.u32 %v622, 7
    %v624 = vsub.s32 %v621, %v623
    %v625 = vrot.slane %v609, %v624
    %v627 = vunpack.c.l.s4 1966171168
    %v628 = vunpack.c.0.s8 %v627
    %v629 = vlaneseq
    %v630 = vshrl.u32 %v629, 7
    %v631 = vsub.s32 %v628, %v630
    %v632 = vrot.slane %v616, %v631
    %v634 = vunpack.c.l.s4 1966171168
    %v635 = vunpack.c.0.s8 %v634
    %v636 = vlaneseq
    %v637 = vshrl.u32 %v636, 7
    %v638 = vsub.s32 %v635, %v637
    %v639 = vrot.slane %v617, %v638
    %v641 = vunpack.c.l.s4 1966171168
    %v642 = vunpack.c.0.s8 %v641
    %v643 = vlaneseq
    %v644 = vshrl.u32 %v643, 7
    %v645 = vsub.s32 %v642, %v644
    %v646 = vrot.slane %v618, %v645
    %v647 = vcombine.high %v625, %v625
    %v648 = vcombine.high %v632, %v632
    %v649 = vcombine.high %v639, %v639
    %v650 = vcombine.high %v646, %v646
    %v651 = vlaneseq
    %v652 = vshrl.u32 %v651, 7
    %v653 = vsub.s32 0, %v652
    %v654 = vrot.slane %v625, %v653
    %v655 = vlaneseq
    %v656 = vshrl.u32 %v655, 7
    %v657 = vsub.s32 0, %v656
    %v658 = vrot.slane %v639, %v657
    %v659 = vlaneseq
    %v660 = vshrl.u32 %v659, 7
    %v661 = vsub.s32 0, %v660
    %v662 = vrot.slane %v647, %v661
    %v663 = vlaneseq
    %v664 = vshrl.u32 %v663, 7
    %v665 = vsub.s32 0, %v664
    %v666 = vrot.slane %v649, %v665
    %v667 = vlaneseq
    %v668 = vshrl.u32 %v667, 7
    %v669 = vsub.s32 0, %v668
    %v670 = vrot.slane %v632, %v669
    %v671 = vlaneseq
    %v672 = vshrl.u32 %v671, 7
    %v673 = vsub.s32 0, %v672
    %v674 = vrot.slane %v646, %v673
    %v675 = vlaneseq
    %v676 = vshrl.u32 %v675, 7
    %v677 = vsub.s32 0, %v676
    %v678 = vrot.slane %v648, %v677
    %v679 = vlaneseq
    %v680 = vshrl.u32 %v679, 7
    %v681 = vsub.s32 0, %v680
    %v682 = vrot.slane %v650, %v681
    %691 = vset.pattern.permute.xlu0 3
    %692 = vperm.xlu0 %691, %v55
    %v693 = vpop.permute.xlu0 %692
    %695 = vset.pattern.permute.xlu0 3
    %696 = vperm.xlu0 %695, %v56
    %v697 = vpop.permute.xlu0 %696
    %699 = vset.pattern.permute.xlu0 3
    %700 = vperm.xlu0 %699, %v57
    %v701 = vpop.permute.xlu0 %700
    %703 = vset.pattern.permute.xlu0 3
    %704 = vperm.xlu0 %703, %v58
    %v705 = vpop.permute.xlu0 %704
    %v707 = vmul.f32 %v654, %v693
    %v708 = vmul.f32 %v654, %v697
    %v709 = vmul.f32 %v654, %v701
    %v710 = vmul.f32 %v654, %v705
    %v711 = vmul.f32 %v658, %v693
    %v712 = vmul.f32 %v658, %v697
    %v713 = vmul.f32 %v658, %v701
    %v714 = vmul.f32 %v658, %v705
    %v715 = vmul.f32 %v662, %v693
    %v716 = vmul.f32 %v662, %v697
    %v717 = vmul.f32 %v662, %v701
    %v718 = vmul.f32 %v662, %v705
    %v719 = vmul.f32 %v666, %v693
    %v720 = vmul.f32 %v666, %v697
    %v721 = vmul.f32 %v666, %v701
    %v722 = vmul.f32 %v666, %v705
    %v723 = vmul.f32 %v670, %v693
    %v724 = vmul.f32 %v670, %v697
    %v725 = vmul.f32 %v670, %v701
    %v726 = vmul.f32 %v670, %v705
    %v727 = vmul.f32 %v674, %v693
    %v728 = vmul.f32 %v674, %v697
    %v729 = vmul.f32 %v674, %v701
    %v730 = vmul.f32 %v674, %v705
    %v731 = vmul.f32 %v678, %v693
    %v732 = vmul.f32 %v678, %v697
    %v733 = vmul.f32 %v678, %v701
    %v734 = vmul.f32 %v678, %v705
    %v735 = vmul.f32 %v682, %v693
    %v736 = vmul.f32 %v682, %v697
    %v737 = vmul.f32 %v682, %v701
    %v738 = vmul.f32 %v682, %v705
    %v739 = vadd.f32 %v568, %v707
    %v740 = vadd.f32 %v569, %v708
    %v741 = vadd.f32 %v570, %v709
    %v742 = vadd.f32 %v571, %v710
    %v743 = vadd.f32 %v572, %v711
    %v744 = vadd.f32 %v573, %v712
    %v745 = vadd.f32 %v574, %v713
    %v746 = vadd.f32 %v575, %v714
    %v747 = vadd.f32 %v576, %v715
    %v748 = vadd.f32 %v577, %v716
    %v749 = vadd.f32 %v578, %v717
    %v750 = vadd.f32 %v579, %v718
    %v751 = vadd.f32 %v580, %v719
    %v752 = vadd.f32 %v581, %v720
    %v753 = vadd.f32 %v582, %v721
    %v754 = vadd.f32 %v583, %v722
    %v755 = vadd.f32 %v584, %v723
    %v756 = vadd.f32 %v585, %v724
    %v757 = vadd.f32 %v586, %v725
    %v758 = vadd.f32 %v587, %v726
    %v759 = vadd.f32 %v588, %v727
    %v760 = vadd.f32 %v589, %v728
    %v761 = vadd.f32 %v590, %v729
    %v762 = vadd.f32 %v591, %v730
    %v763 = vadd.f32 %v592, %v731
    %v764 = vadd.f32 %v593, %v732
    %v765 = vadd.f32 %v594, %v733
    %v766 = vadd.f32 %v595, %v734
    %v767 = vadd.f32 %v596, %v735
    %v768 = vadd.f32 %v597, %v736
    %v769 = vadd.f32 %v598, %v737
    %v770 = vadd.f32 %v599, %v738
    %v771 = vmax.f32 %v739, 0.0
    %v772 = vmax.f32 %v740, 0.0
    %v773 = vmax.f32 %v741, 0.0
    %v774 = vmax.f32 %v742, 0.0
    %v775 = vmax.f32 %v743, 0.0
    %v776 = vmax.f32 %v744, 0.0
    %v777 = vmax.f32 %v745, 0.0
    %v778 = vmax.f32 %v746, 0.0
    %v779 = vmax.f32 %v747, 0.0
    %v780 = vmax.f32 %v748, 0.0
    %v781 = vmax.f32 %v749, 0.0
    %v782 = vmax.f32 %v750, 0.0
    %v783 = vmax.f32 %v751, 0.0
    %v784 = vmax.f32 %v752, 0.0
    %v785 = vmax.f32 %v753, 0.0
    %v786 = vmax.f32 %v754, 0.0
    %v787 = vmax.f32 %v755, 0.0
    %v788 = vmax.f32 %v756, 0.0
    %v789 = vmax.f32 %v757, 0.0
    %v790 = vmax.f32 %v758, 0.0
    %v791 = vmax.f32 %v759, 0.0
    %v792 = vmax.f32 %v760, 0.0
    %v793 = vmax.f32 %v761, 0.0
    %v794 = vmax.f32 %v762, 0.0
    %v795 = vmax.f32 %v763, 0.0
    %v796 = vmax.f32 %v764, 0.0
    %v797 = vmax.f32 %v765, 0.0
    %v798 = vmax.f32 %v766, 0.0
    %v799 = vmax.f32 %v767, 0.0
    %v800 = vmax.f32 %v768, 0.0
    %v801 = vmax.f32 %v769, 0.0
    %v802 = vmax.f32 %v770, 0.0
    %803 = vadd.xlane.f32.xlu0 %v771
    %v804 = vpop.xlane.xlu0 %803
    %805 = vadd.xlane.f32.xlu0 %v772
    %v806 = vpop.xlane.xlu0 %805
    %807 = vadd.xlane.f32.xlu0 %v773
    %v808 = vpop.xlane.xlu0 %807
    %809 = vadd.xlane.f32.xlu0 %v774
    %v810 = vpop.xlane.xlu0 %809
    %811 = vadd.xlane.f32.xlu0 %v775
    %v812 = vpop.xlane.xlu0 %811
    %813 = vadd.xlane.f32.xlu0 %v776
    %v814 = vpop.xlane.xlu0 %813
    %815 = vadd.xlane.f32.xlu0 %v777
    %v816 = vpop.xlane.xlu0 %815
    %817 = vadd.xlane.f32.xlu0 %v778
    %v818 = vpop.xlane.xlu0 %817
    %819 = vadd.xlane.f32.xlu0 %v779
    %v820 = vpop.xlane.xlu0 %819
    %821 = vadd.xlane.f32.xlu0 %v780
    %v822 = vpop.xlane.xlu0 %821
    %823 = vadd.xlane.f32.xlu0 %v781
    %v824 = vpop.xlane.xlu0 %823
    %825 = vadd.xlane.f32.xlu0 %v782
    %v826 = vpop.xlane.xlu0 %825
    %827 = vadd.xlane.f32.xlu0 %v783
    %v828 = vpop.xlane.xlu0 %827
    %829 = vadd.xlane.f32.xlu0 %v784
    %v830 = vpop.xlane.xlu0 %829
    %831 = vadd.xlane.f32.xlu0 %v785
    %v832 = vpop.xlane.xlu0 %831
    %833 = vadd.xlane.f32.xlu0 %v786
    %v834 = vpop.xlane.xlu0 %833
    %835 = vadd.xlane.f32.xlu0 %v787
    %v836 = vpop.xlane.xlu0 %835
    %837 = vadd.xlane.f32.xlu0 %v788
    %v838 = vpop.xlane.xlu0 %837
    %839 = vadd.xlane.f32.xlu0 %v789
    %v840 = vpop.xlane.xlu0 %839
    %841 = vadd.xlane.f32.xlu0 %v790
    %v842 = vpop.xlane.xlu0 %841
    %843 = vadd.xlane.f32.xlu0 %v791
    %v844 = vpop.xlane.xlu0 %843
    %845 = vadd.xlane.f32.xlu0 %v792
    %v846 = vpop.xlane.xlu0 %845
    %847 = vadd.xlane.f32.xlu0 %v793
    %v848 = vpop.xlane.xlu0 %847
    %849 = vadd.xlane.f32.xlu0 %v794
    %v850 = vpop.xlane.xlu0 %849
    %851 = vadd.xlane.f32.xlu0 %v795
    %v852 = vpop.xlane.xlu0 %851
    %853 = vadd.xlane.f32.xlu0 %v796
    %v854 = vpop.xlane.xlu0 %853
    %855 = vadd.xlane.f32.xlu0 %v797
    %v856 = vpop.xlane.xlu0 %855
    %857 = vadd.xlane.f32.xlu0 %v798
    %v858 = vpop.xlane.xlu0 %857
    %859 = vadd.xlane.f32.xlu0 %v799
    %v860 = vpop.xlane.xlu0 %859
    %861 = vadd.xlane.f32.xlu0 %v800
    %v862 = vpop.xlane.xlu0 %861
    %863 = vadd.xlane.f32.xlu0 %v801
    %v864 = vpop.xlane.xlu0 %863
    %865 = vadd.xlane.f32.xlu0 %v802
    %v866 = vpop.xlane.xlu0 %865
    %v867 = vld [vmem:[%s0 + $0x8] sm:$0xff]
    %v869 = vcombine.high %v867, %v867
    %v871 = vunpack.c.l.s4 1966171168
    %v872 = vunpack.c.0.s8 %v871
    %v873 = vlaneseq
    %v874 = vshrl.u32 %v873, 7
    %v875 = vsub.s32 %v872, %v874
    %v876 = vrot.slane %v867, %v875
    %v878 = vunpack.c.l.s4 1966171168
    %v879 = vunpack.c.0.s8 %v878
    %v880 = vlaneseq
    %v881 = vshrl.u32 %v880, 7
    %v882 = vsub.s32 %v879, %v881
    %v883 = vrot.slane %v869, %v882
    %v884 = vcombine.high %v876, %v876
    %v885 = vcombine.high %v883, %v883
    %v887 = vunpack.c.l.s4 1966171168
    %v888 = vunpack.c.0.s8 %v887
    %v889 = vlaneseq
    %v890 = vshrl.u32 %v889, 7
    %v891 = vsub.s32 %v888, %v890
    %v892 = vrot.slane %v876, %v891
    %v894 = vunpack.c.l.s4 1966171168
    %v895 = vunpack.c.0.s8 %v894
    %v896 = vlaneseq
    %v897 = vshrl.u32 %v896, 7
    %v898 = vsub.s32 %v895, %v897
    %v899 = vrot.slane %v883, %v898
    %v901 = vunpack.c.l.s4 1966171168
    %v902 = vunpack.c.0.s8 %v901
    %v903 = vlaneseq
    %v904 = vshrl.u32 %v903, 7
    %v905 = vsub.s32 %v902, %v904
    %v906 = vrot.slane %v884, %v905
    %v908 = vunpack.c.l.s4 1966171168
    %v909 = vunpack.c.0.s8 %v908
    %v910 = vlaneseq
    %v911 = vshrl.u32 %v910, 7
    %v912 = vsub.s32 %v909, %v911
    %v913 = vrot.slane %v885, %v912
    %v914 = vcombine.high %v892, %v892
    %v915 = vcombine.high %v899, %v899
    %v916 = vcombine.high %v906, %v906
    %v917 = vcombine.high %v913, %v913
    %v918 = vlaneseq
    %v919 = vshrl.u32 %v918, 7
    %v920 = vsub.s32 0, %v919
    %v921 = vrot.slane %v892, %v920
    %v922 = vlaneseq
    %v923 = vshrl.u32 %v922, 7
    %v924 = vsub.s32 0, %v923
    %v925 = vrot.slane %v906, %v924
    %v926 = vlaneseq
    %v927 = vshrl.u32 %v926, 7
    %v928 = vsub.s32 0, %v927
    %v929 = vrot.slane %v914, %v928
    %v930 = vlaneseq
    %v931 = vshrl.u32 %v930, 7
    %v932 = vsub.s32 0, %v931
    %v933 = vrot.slane %v916, %v932
    %v934 = vlaneseq
    %v935 = vshrl.u32 %v934, 7
    %v936 = vsub.s32 0, %v935
    %v937 = vrot.slane %v899, %v936
    %v938 = vlaneseq
    %v939 = vshrl.u32 %v938, 7
    %v940 = vsub.s32 0, %v939
    %v941 = vrot.slane %v913, %v940
    %v942 = vlaneseq
    %v943 = vshrl.u32 %v942, 7
    %v944 = vsub.s32 0, %v943
    %v945 = vrot.slane %v915, %v944
    %v946 = vlaneseq
    %v947 = vshrl.u32 %v946, 7
    %v948 = vsub.s32 0, %v947
    %v949 = vrot.slane %v917, %v948
    %v958 = vmul.f32 %v921, %v157
    %v959 = vmul.f32 %v921, %v162
    %v960 = vmul.f32 %v921, %v167
    %v961 = vmul.f32 %v921, %v172
    %v962 = vmul.f32 %v925, %v157
    %v963 = vmul.f32 %v925, %v162
    %v964 = vmul.f32 %v925, %v167
    %v965 = vmul.f32 %v925, %v172
    %v966 = vmul.f32 %v929, %v157
    %v967 = vmul.f32 %v929, %v162
    %v968 = vmul.f32 %v929, %v167
    %v969 = vmul.f32 %v929, %v172
    %v970 = vmul.f32 %v933, %v157
    %v971 = vmul.f32 %v933, %v162
    %v972 = vmul.f32 %v933, %v167
    %v973 = vmul.f32 %v933, %v172
    %v974 = vmul.f32 %v937, %v157
    %v975 = vmul.f32 %v937, %v162
    %v976 = vmul.f32 %v937, %v167
    %v977 = vmul.f32 %v937, %v172
    %v978 = vmul.f32 %v941, %v157
    %v979 = vmul.f32 %v941, %v162
    %v980 = vmul.f32 %v941, %v167
    %v981 = vmul.f32 %v941, %v172
    %v982 = vmul.f32 %v945, %v157
    %v983 = vmul.f32 %v945, %v162
    %v984 = vmul.f32 %v945, %v167
    %v985 = vmul.f32 %v945, %v172
    %v986 = vmul.f32 %v949, %v157
    %v987 = vmul.f32 %v949, %v162
    %v988 = vmul.f32 %v949, %v167
    %v989 = vmul.f32 %v949, %v172
    %v990 = vadd.f32 %v209, %v958
    %v991 = vadd.f32 %v214, %v959
    %v992 = vadd.f32 %v219, %v960
    %v993 = vadd.f32 %v224, %v961
    %v994 = vadd.f32 %v209, %v962
    %v995 = vadd.f32 %v214, %v963
    %v996 = vadd.f32 %v219, %v964
    %v997 = vadd.f32 %v224, %v965
    %v998 = vadd.f32 %v209, %v966
    %v999 = vadd.f32 %v214, %v967
    %v1000 = vadd.f32 %v219, %v968
    %v1001 = vadd.f32 %v224, %v969
    %v1002 = vadd.f32 %v209, %v970
    %v1003 = vadd.f32 %v214, %v971
    %v1004 = vadd.f32 %v219, %v972
    %v1005 = vadd.f32 %v224, %v973
    %v1006 = vadd.f32 %v209, %v974
    %v1007 = vadd.f32 %v214, %v975
    %v1008 = vadd.f32 %v219, %v976
    %v1009 = vadd.f32 %v224, %v977
    %v1010 = vadd.f32 %v209, %v978
    %v1011 = vadd.f32 %v214, %v979
    %v1012 = vadd.f32 %v219, %v980
    %v1013 = vadd.f32 %v224, %v981
    %v1014 = vadd.f32 %v209, %v982
    %v1015 = vadd.f32 %v214, %v983
    %v1016 = vadd.f32 %v219, %v984
    %v1017 = vadd.f32 %v224, %v985
    %v1018 = vadd.f32 %v209, %v986
    %v1019 = vadd.f32 %v214, %v987
    %v1020 = vadd.f32 %v219, %v988
    %v1021 = vadd.f32 %v224, %v989
    %v1022 = vld [vmem:[%s0 + $0x18] sm:$0xff]
    %v1024 = vcombine.high %v1022, %v1022
    %v1026 = vunpack.c.l.s4 1966171168
    %v1027 = vunpack.c.0.s8 %v1026
    %v1028 = vlaneseq
    %v1029 = vshrl.u32 %v1028, 7
    %v1030 = vsub.s32 %v1027, %v1029
    %v1031 = vrot.slane %v1022, %v1030
    %v1033 = vunpack.c.l.s4 1966171168
    %v1034 = vunpack.c.0.s8 %v1033
    %v1035 = vlaneseq
    %v1036 = vshrl.u32 %v1035, 7
    %v1037 = vsub.s32 %v1034, %v1036
    %v1038 = vrot.slane %v1024, %v1037
    %v1039 = vcombine.high %v1031, %v1031
    %v1040 = vcombine.high %v1038, %v1038
    %v1042 = vunpack.c.l.s4 1966171168
    %v1043 = vunpack.c.0.s8 %v1042
    %v1044 = vlaneseq
    %v1045 = vshrl.u32 %v1044, 7
    %v1046 = vsub.s32 %v1043, %v1045
    %v1047 = vrot.slane %v1031, %v1046
    %v1049 = vunpack.c.l.s4 1966171168
    %v1050 = vunpack.c.0.s8 %v1049
    %v1051 = vlaneseq
    %v1052 = vshrl.u32 %v1051, 7
    %v1053 = vsub.s32 %v1050, %v1052
    %v1054 = vrot.slane %v1038, %v1053
    %v1056 = vunpack.c.l.s4 1966171168
    %v1057 = vunpack.c.0.s8 %v1056
    %v1058 = vlaneseq
    %v1059 = vshrl.u32 %v1058, 7
    %v1060 = vsub.s32 %v1057, %v1059
    %v1061 = vrot.slane %v1039, %v1060
    %v1063 = vunpack.c.l.s4 1966171168
    %v1064 = vunpack.c.0.s8 %v1063
    %v1065 = vlaneseq
    %v1066 = vshrl.u32 %v1065, 7
    %v1067 = vsub.s32 %v1064, %v1066
    %v1068 = vrot.slane %v1040, %v1067
    %v1069 = vcombine.high %v1047, %v1047
    %v1070 = vcombine.high %v1054, %v1054
    %v1071 = vcombine.high %v1061, %v1061
    %v1072 = vcombine.high %v1068, %v1068
    %v1073 = vlaneseq
    %v1074 = vshrl.u32 %v1073, 7
    %v1075 = vsub.s32 0, %v1074
    %v1076 = vrot.slane %v1047, %v1075
    %v1077 = vlaneseq
    %v1078 = vshrl.u32 %v1077, 7
    %v1079 = vsub.s32 0, %v1078
    %v1080 = vrot.slane %v1061, %v1079
    %v1081 = vlaneseq
    %v1082 = vshrl.u32 %v1081, 7
    %v1083 = vsub.s32 0, %v1082
    %v1084 = vrot.slane %v1069, %v1083
    %v1085 = vlaneseq
    %v1086 = vshrl.u32 %v1085, 7
    %v1087 = vsub.s32 0, %v1086
    %v1088 = vrot.slane %v1071, %v1087
    %v1089 = vlaneseq
    %v1090 = vshrl.u32 %v1089, 7
    %v1091 = vsub.s32 0, %v1090
    %v1092 = vrot.slane %v1054, %v1091
    %v1093 = vlaneseq
    %v1094 = vshrl.u32 %v1093, 7
    %v1095 = vsub.s32 0, %v1094
    %v1096 = vrot.slane %v1068, %v1095
    %v1097 = vlaneseq
    %v1098 = vshrl.u32 %v1097, 7
    %v1099 = vsub.s32 0, %v1098
    %v1100 = vrot.slane %v1070, %v1099
    %v1101 = vlaneseq
    %v1102 = vshrl.u32 %v1101, 7
    %v1103 = vsub.s32 0, %v1102
    %v1104 = vrot.slane %v1072, %v1103
    %v1113 = vmul.f32 %v1076, %v351
    %v1114 = vmul.f32 %v1076, %v355
    %v1115 = vmul.f32 %v1076, %v359
    %v1116 = vmul.f32 %v1076, %v363
    %v1117 = vmul.f32 %v1080, %v351
    %v1118 = vmul.f32 %v1080, %v355
    %v1119 = vmul.f32 %v1080, %v359
    %v1120 = vmul.f32 %v1080, %v363
    %v1121 = vmul.f32 %v1084, %v351
    %v1122 = vmul.f32 %v1084, %v355
    %v1123 = vmul.f32 %v1084, %v359
    %v1124 = vmul.f32 %v1084, %v363
    %v1125 = vmul.f32 %v1088, %v351
    %v1126 = vmul.f32 %v1088, %v355
    %v1127 = vmul.f32 %v1088, %v359
    %v1128 = vmul.f32 %v1088, %v363
    %v1129 = vmul.f32 %v1092, %v351
    %v1130 = vmul.f32 %v1092, %v355
    %v1131 = vmul.f32 %v1092, %v359
    %v1132 = vmul.f32 %v1092, %v363
    %v1133 = vmul.f32 %v1096, %v351
    %v1134 = vmul.f32 %v1096, %v355
    %v1135 = vmul.f32 %v1096, %v359
    %v1136 = vmul.f32 %v1096, %v363
    %v1137 = vmul.f32 %v1100, %v351
    %v1138 = vmul.f32 %v1100, %v355
    %v1139 = vmul.f32 %v1100, %v359
    %v1140 = vmul.f32 %v1100, %v363
    %v1141 = vmul.f32 %v1104, %v351
    %v1142 = vmul.f32 %v1104, %v355
    %v1143 = vmul.f32 %v1104, %v359
    %v1144 = vmul.f32 %v1104, %v363
    %v1145 = vadd.f32 %v990, %v1113
    %v1146 = vadd.f32 %v991, %v1114
    %v1147 = vadd.f32 %v992, %v1115
    %v1148 = vadd.f32 %v993, %v1116
    %v1149 = vadd.f32 %v994, %v1117
    %v1150 = vadd.f32 %v995, %v1118
    %v1151 = vadd.f32 %v996, %v1119
    %v1152 = vadd.f32 %v997, %v1120
    %v1153 = vadd.f32 %v998, %v1121
    %v1154 = vadd.f32 %v999, %v1122
    %v1155 = vadd.f32 %v1000, %v1123
    %v1156 = vadd.f32 %v1001, %v1124
    %v1157 = vadd.f32 %v1002, %v1125
    %v1158 = vadd.f32 %v1003, %v1126
    %v1159 = vadd.f32 %v1004, %v1127
    %v1160 = vadd.f32 %v1005, %v1128
    %v1161 = vadd.f32 %v1006, %v1129
    %v1162 = vadd.f32 %v1007, %v1130
    %v1163 = vadd.f32 %v1008, %v1131
    %v1164 = vadd.f32 %v1009, %v1132
    %v1165 = vadd.f32 %v1010, %v1133
    %v1166 = vadd.f32 %v1011, %v1134
    %v1167 = vadd.f32 %v1012, %v1135
    %v1168 = vadd.f32 %v1013, %v1136
    %v1169 = vadd.f32 %v1014, %v1137
    %v1170 = vadd.f32 %v1015, %v1138
    %v1171 = vadd.f32 %v1016, %v1139
    %v1172 = vadd.f32 %v1017, %v1140
    %v1173 = vadd.f32 %v1018, %v1141
    %v1174 = vadd.f32 %v1019, %v1142
    %v1175 = vadd.f32 %v1020, %v1143
    %v1176 = vadd.f32 %v1021, %v1144
    %v1177 = vld [vmem:[%s0 + $0x28] sm:$0xff]
    %v1179 = vcombine.high %v1177, %v1177
    %v1181 = vunpack.c.l.s4 1966171168
    %v1182 = vunpack.c.0.s8 %v1181
    %v1183 = vlaneseq
    %v1184 = vshrl.u32 %v1183, 7
    %v1185 = vsub.s32 %v1182, %v1184
    %v1186 = vrot.slane %v1177, %v1185
    %v1188 = vunpack.c.l.s4 1966171168
    %v1189 = vunpack.c.0.s8 %v1188
    %v1190 = vlaneseq
    %v1191 = vshrl.u32 %v1190, 7
    %v1192 = vsub.s32 %v1189, %v1191
    %v1193 = vrot.slane %v1179, %v1192
    %v1194 = vcombine.high %v1186, %v1186
    %v1195 = vcombine.high %v1193, %v1193
    %v1197 = vunpack.c.l.s4 1966171168
    %v1198 = vunpack.c.0.s8 %v1197
    %v1199 = vlaneseq
    %v1200 = vshrl.u32 %v1199, 7
    %v1201 = vsub.s32 %v1198, %v1200
    %v1202 = vrot.slane %v1186, %v1201
    %v1204 = vunpack.c.l.s4 1966171168
    %v1205 = vunpack.c.0.s8 %v1204
    %v1206 = vlaneseq
    %v1207 = vshrl.u32 %v1206, 7
    %v1208 = vsub.s32 %v1205, %v1207
    %v1209 = vrot.slane %v1193, %v1208
    %v1211 = vunpack.c.l.s4 1966171168
    %v1212 = vunpack.c.0.s8 %v1211
    %v1213 = vlaneseq
    %v1214 = vshrl.u32 %v1213, 7
    %v1215 = vsub.s32 %v1212, %v1214
    %v1216 = vrot.slane %v1194, %v1215
    %v1218 = vunpack.c.l.s4 1966171168
    %v1219 = vunpack.c.0.s8 %v1218
    %v1220 = vlaneseq
    %v1221 = vshrl.u32 %v1220, 7
    %v1222 = vsub.s32 %v1219, %v1221
    %v1223 = vrot.slane %v1195, %v1222
    %v1224 = vcombine.high %v1202, %v1202
    %v1225 = vcombine.high %v1209, %v1209
    %v1226 = vcombine.high %v1216, %v1216
    %v1227 = vcombine.high %v1223, %v1223
    %v1228 = vlaneseq
    %v1229 = vshrl.u32 %v1228, 7
    %v1230 = vsub.s32 0, %v1229
    %v1231 = vrot.slane %v1202, %v1230
    %v1232 = vlaneseq
    %v1233 = vshrl.u32 %v1232, 7
    %v1234 = vsub.s32 0, %v1233
    %v1235 = vrot.slane %v1216, %v1234
    %v1236 = vlaneseq
    %v1237 = vshrl.u32 %v1236, 7
    %v1238 = vsub.s32 0, %v1237
    %v1239 = vrot.slane %v1224, %v1238
    %v1240 = vlaneseq
    %v1241 = vshrl.u32 %v1240, 7
    %v1242 = vsub.s32 0, %v1241
    %v1243 = vrot.slane %v1226, %v1242
    %v1244 = vlaneseq
    %v1245 = vshrl.u32 %v1244, 7
    %v1246 = vsub.s32 0, %v1245
    %v1247 = vrot.slane %v1209, %v1246
    %v1248 = vlaneseq
    %v1249 = vshrl.u32 %v1248, 7
    %v1250 = vsub.s32 0, %v1249
    %v1251 = vrot.slane %v1223, %v1250
    %v1252 = vlaneseq
    %v1253 = vshrl.u32 %v1252, 7
    %v1254 = vsub.s32 0, %v1253
    %v1255 = vrot.slane %v1225, %v1254
    %v1256 = vlaneseq
    %v1257 = vshrl.u32 %v1256, 7
    %v1258 = vsub.s32 0, %v1257
    %v1259 = vrot.slane %v1227, %v1258
    %v1268 = vmul.f32 %v1231, %v522
    %v1269 = vmul.f32 %v1231, %v526
    %v1270 = vmul.f32 %v1231, %v530
    %v1271 = vmul.f32 %v1231, %v534
    %v1272 = vmul.f32 %v1235, %v522
    %v1273 = vmul.f32 %v1235, %v526
    %v1274 = vmul.f32 %v1235, %v530
    %v1275 = vmul.f32 %v1235, %v534
    %v1276 = vmul.f32 %v1239, %v522
    %v1277 = vmul.f32 %v1239, %v526
    %v1278 = vmul.f32 %v1239, %v530
    %v1279 = vmul.f32 %v1239, %v534
    %v1280 = vmul.f32 %v1243, %v522
    %v1281 = vmul.f32 %v1243, %v526
    %v1282 = vmul.f32 %v1243, %v530
    %v1283 = vmul.f32 %v1243, %v534
    %v1284 = vmul.f32 %v1247, %v522
    %v1285 = vmul.f32 %v1247, %v526
    %v1286 = vmul.f32 %v1247, %v530
    %v1287 = vmul.f32 %v1247, %v534
    %v1288 = vmul.f32 %v1251, %v522
    %v1289 = vmul.f32 %v1251, %v526
    %v1290 = vmul.f32 %v1251, %v530
    %v1291 = vmul.f32 %v1251, %v534
    %v1292 = vmul.f32 %v1255, %v522
    %v1293 = vmul.f32 %v1255, %v526
    %v1294 = vmul.f32 %v1255, %v530
    %v1295 = vmul.f32 %v1255, %v534
    %v1296 = vmul.f32 %v1259, %v522
    %v1297 = vmul.f32 %v1259, %v526
    %v1298 = vmul.f32 %v1259, %v530
    %v1299 = vmul.f32 %v1259, %v534
    %v1300 = vadd.f32 %v1145, %v1268
    %v1301 = vadd.f32 %v1146, %v1269
    %v1302 = vadd.f32 %v1147, %v1270
    %v1303 = vadd.f32 %v1148, %v1271
    %v1304 = vadd.f32 %v1149, %v1272
    %v1305 = vadd.f32 %v1150, %v1273
    %v1306 = vadd.f32 %v1151, %v1274
    %v1307 = vadd.f32 %v1152, %v1275
    %v1308 = vadd.f32 %v1153, %v1276
    %v1309 = vadd.f32 %v1154, %v1277
    %v1310 = vadd.f32 %v1155, %v1278
    %v1311 = vadd.f32 %v1156, %v1279
    %v1312 = vadd.f32 %v1157, %v1280
    %v1313 = vadd.f32 %v1158, %v1281
    %v1314 = vadd.f32 %v1159, %v1282
    %v1315 = vadd.f32 %v1160, %v1283
    %v1316 = vadd.f32 %v1161, %v1284
    %v1317 = vadd.f32 %v1162, %v1285
    %v1318 = vadd.f32 %v1163, %v1286
    %v1319 = vadd.f32 %v1164, %v1287
    %v1320 = vadd.f32 %v1165, %v1288
    %v1321 = vadd.f32 %v1166, %v1289
    %v1322 = vadd.f32 %v1167, %v1290
    %v1323 = vadd.f32 %v1168, %v1291
    %v1324 = vadd.f32 %v1169, %v1292
    %v1325 = vadd.f32 %v1170, %v1293
    %v1326 = vadd.f32 %v1171, %v1294
    %v1327 = vadd.f32 %v1172, %v1295
    %v1328 = vadd.f32 %v1173, %v1296
    %v1329 = vadd.f32 %v1174, %v1297
    %v1330 = vadd.f32 %v1175, %v1298
    %v1331 = vadd.f32 %v1176, %v1299
    %v1332 = vld [vmem:[%s0 + $0x38] sm:$0xff]
    %v1334 = vcombine.high %v1332, %v1332
    %v1336 = vunpack.c.l.s4 1966171168
    %v1337 = vunpack.c.0.s8 %v1336
    %v1338 = vlaneseq
    %v1339 = vshrl.u32 %v1338, 7
    %v1340 = vsub.s32 %v1337, %v1339
    %v1341 = vrot.slane %v1332, %v1340
    %v1343 = vunpack.c.l.s4 1966171168
    %v1344 = vunpack.c.0.s8 %v1343
    %v1345 = vlaneseq
    %v1346 = vshrl.u32 %v1345, 7
    %v1347 = vsub.s32 %v1344, %v1346
    %v1348 = vrot.slane %v1334, %v1347
    %v1349 = vcombine.high %v1341, %v1341
    %v1350 = vcombine.high %v1348, %v1348
    %v1352 = vunpack.c.l.s4 1966171168
    %v1353 = vunpack.c.0.s8 %v1352
    %v1354 = vlaneseq
    %v1355 = vshrl.u32 %v1354, 7
    %v1356 = vsub.s32 %v1353, %v1355
    %v1357 = vrot.slane %v1341, %v1356
    %v1359 = vunpack.c.l.s4 1966171168
    %v1360 = vunpack.c.0.s8 %v1359
    %v1361 = vlaneseq
    %v1362 = vshrl.u32 %v1361, 7
    %v1363 = vsub.s32 %v1360, %v1362
    %v1364 = vrot.slane %v1348, %v1363
    %v1366 = vunpack.c.l.s4 1966171168
    %v1367 = vunpack.c.0.s8 %v1366
    %v1368 = vlaneseq
    %v1369 = vshrl.u32 %v1368, 7
    %v1370 = vsub.s32 %v1367, %v1369
    %v1371 = vrot.slane %v1349, %v1370
    %v1373 = vunpack.c.l.s4 1966171168
    %v1374 = vunpack.c.0.s8 %v1373
    %v1375 = vlaneseq
    %v1376 = vshrl.u32 %v1375, 7
    %v1377 = vsub.s32 %v1374, %v1376
    %v1378 = vrot.slane %v1350, %v1377
    %v1379 = vcombine.high %v1357, %v1357
    %v1380 = vcombine.high %v1364, %v1364
    %v1381 = vcombine.high %v1371, %v1371
    %v1382 = vcombine.high %v1378, %v1378
    %v1383 = vlaneseq
    %v1384 = vshrl.u32 %v1383, 7
    %v1385 = vsub.s32 0, %v1384
    %v1386 = vrot.slane %v1357, %v1385
    %v1387 = vlaneseq
    %v1388 = vshrl.u32 %v1387, 7
    %v1389 = vsub.s32 0, %v1388
    %v1390 = vrot.slane %v1371, %v1389
    %v1391 = vlaneseq
    %v1392 = vshrl.u32 %v1391, 7
    %v1393 = vsub.s32 0, %v1392
    %v1394 = vrot.slane %v1379, %v1393
    %v1395 = vlaneseq
    %v1396 = vshrl.u32 %v1395, 7
    %v1397 = vsub.s32 0, %v1396
    %v1398 = vrot.slane %v1381, %v1397
    %v1399 = vlaneseq
    %v1400 = vshrl.u32 %v1399, 7
    %v1401 = vsub.s32 0, %v1400
    %v1402 = vrot.slane %v1364, %v1401
    %v1403 = vlaneseq
    %v1404 = vshrl.u32 %v1403, 7
    %v1405 = vsub.s32 0, %v1404
    %v1406 = vrot.slane %v1378, %v1405
    %v1407 = vlaneseq
    %v1408 = vshrl.u32 %v1407, 7
    %v1409 = vsub.s32 0, %v1408
    %v1410 = vrot.slane %v1380, %v1409
    %v1411 = vlaneseq
    %v1412 = vshrl.u32 %v1411, 7
    %v1413 = vsub.s32 0, %v1412
    %v1414 = vrot.slane %v1382, %v1413
    %v1423 = vmul.f32 %v1386, %v693
    %v1424 = vmul.f32 %v1386, %v697
    %v1425 = vmul.f32 %v1386, %v701
    %v1426 = vmul.f32 %v1386, %v705
    %v1427 = vmul.f32 %v1390, %v693
    %v1428 = vmul.f32 %v1390, %v697
    %v1429 = vmul.f32 %v1390, %v701
    %v1430 = vmul.f32 %v1390, %v705
    %v1431 = vmul.f32 %v1394, %v693
    %v1432 = vmul.f32 %v1394, %v697
    %v1433 = vmul.f32 %v1394, %v701
    %v1434 = vmul.f32 %v1394, %v705
    %v1435 = vmul.f32 %v1398, %v693
    %v1436 = vmul.f32 %v1398, %v697
    %v1437 = vmul.f32 %v1398, %v701
    %v1438 = vmul.f32 %v1398, %v705
    %v1439 = vmul.f32 %v1402, %v693
    %v1440 = vmul.f32 %v1402, %v697
    %v1441 = vmul.f32 %v1402, %v701
    %v1442 = vmul.f32 %v1402, %v705
    %v1443 = vmul.f32 %v1406, %v693
    %v1444 = vmul.f32 %v1406, %v697
    %v1445 = vmul.f32 %v1406, %v701
    %v1446 = vmul.f32 %v1406, %v705
    %v1447 = vmul.f32 %v1410, %v693
    %v1448 = vmul.f32 %v1410, %v697
    %v1449 = vmul.f32 %v1410, %v701
    %v1450 = vmul.f32 %v1410, %v705
    %v1451 = vmul.f32 %v1414, %v693
    %v1452 = vmul.f32 %v1414, %v697
    %v1453 = vmul.f32 %v1414, %v701
    %v1454 = vmul.f32 %v1414, %v705
    %v1455 = vadd.f32 %v1300, %v1423
    %v1456 = vadd.f32 %v1301, %v1424
    %v1457 = vadd.f32 %v1302, %v1425
    %v1458 = vadd.f32 %v1303, %v1426
    %v1459 = vadd.f32 %v1304, %v1427
    %v1460 = vadd.f32 %v1305, %v1428
    %v1461 = vadd.f32 %v1306, %v1429
    %v1462 = vadd.f32 %v1307, %v1430
    %v1463 = vadd.f32 %v1308, %v1431
    %v1464 = vadd.f32 %v1309, %v1432
    %v1465 = vadd.f32 %v1310, %v1433
    %v1466 = vadd.f32 %v1311, %v1434
    %v1467 = vadd.f32 %v1312, %v1435
    %v1468 = vadd.f32 %v1313, %v1436
    %v1469 = vadd.f32 %v1314, %v1437
    %v1470 = vadd.f32 %v1315, %v1438
    %v1471 = vadd.f32 %v1316, %v1439
    %v1472 = vadd.f32 %v1317, %v1440
    %v1473 = vadd.f32 %v1318, %v1441
    %v1474 = vadd.f32 %v1319, %v1442
    %v1475 = vadd.f32 %v1320, %v1443
    %v1476 = vadd.f32 %v1321, %v1444
    %v1477 = vadd.f32 %v1322, %v1445
    %v1478 = vadd.f32 %v1323, %v1446
    %v1479 = vadd.f32 %v1324, %v1447
    %v1480 = vadd.f32 %v1325, %v1448
    %v1481 = vadd.f32 %v1326, %v1449
    %v1482 = vadd.f32 %v1327, %v1450
    %v1483 = vadd.f32 %v1328, %v1451
    %v1484 = vadd.f32 %v1329, %v1452
    %v1485 = vadd.f32 %v1330, %v1453
    %v1486 = vadd.f32 %v1331, %v1454
    %v1487 = vmax.f32 %v1455, 0.0
    %v1488 = vmax.f32 %v1456, 0.0
    %v1489 = vmax.f32 %v1457, 0.0
    %v1490 = vmax.f32 %v1458, 0.0
    %v1491 = vmax.f32 %v1459, 0.0
    %v1492 = vmax.f32 %v1460, 0.0
    %v1493 = vmax.f32 %v1461, 0.0
    %v1494 = vmax.f32 %v1462, 0.0
    %v1495 = vmax.f32 %v1463, 0.0
    %v1496 = vmax.f32 %v1464, 0.0
    %v1497 = vmax.f32 %v1465, 0.0
    %v1498 = vmax.f32 %v1466, 0.0
    %v1499 = vmax.f32 %v1467, 0.0
    %v1500 = vmax.f32 %v1468, 0.0
    %v1501 = vmax.f32 %v1469, 0.0
    %v1502 = vmax.f32 %v1470, 0.0
    %v1503 = vmax.f32 %v1471, 0.0
    %v1504 = vmax.f32 %v1472, 0.0
    %v1505 = vmax.f32 %v1473, 0.0
    %v1506 = vmax.f32 %v1474, 0.0
    %v1507 = vmax.f32 %v1475, 0.0
    %v1508 = vmax.f32 %v1476, 0.0
    %v1509 = vmax.f32 %v1477, 0.0
    %v1510 = vmax.f32 %v1478, 0.0
    %v1511 = vmax.f32 %v1479, 0.0
    %v1512 = vmax.f32 %v1480, 0.0
    %v1513 = vmax.f32 %v1481, 0.0
    %v1514 = vmax.f32 %v1482, 0.0
    %v1515 = vmax.f32 %v1483, 0.0
    %v1516 = vmax.f32 %v1484, 0.0
    %v1517 = vmax.f32 %v1485, 0.0
    %v1518 = vmax.f32 %v1486, 0.0
    %1519 = vadd.xlane.f32.xlu0 %v1487
    %v1520 = vpop.xlane.xlu0 %1519
    %1521 = vadd.xlane.f32.xlu0 %v1488
    %v1522 = vpop.xlane.xlu0 %1521
    %1523 = vadd.xlane.f32.xlu0 %v1489
    %v1524 = vpop.xlane.xlu0 %1523
    %1525 = vadd.xlane.f32.xlu0 %v1490
    %v1526 = vpop.xlane.xlu0 %1525
    %1527 = vadd.xlane.f32.xlu0 %v1491
    %v1528 = vpop.xlane.xlu0 %1527
    %1529 = vadd.xlane.f32.xlu0 %v1492
    %v1530 = vpop.xlane.xlu0 %1529
    %1531 = vadd.xlane.f32.xlu0 %v1493
    %v1532 = vpop.xlane.xlu0 %1531
    %1533 = vadd.xlane.f32.xlu0 %v1494
    %v1534 = vpop.xlane.xlu0 %1533
    %1535 = vadd.xlane.f32.xlu0 %v1495
    %v1536 = vpop.xlane.xlu0 %1535
    %1537 = vadd.xlane.f32.xlu0 %v1496
    %v1538 = vpop.xlane.xlu0 %1537
    %1539 = vadd.xlane.f32.xlu0 %v1497
    %v1540 = vpop.xlane.xlu0 %1539
    %1541 = vadd.xlane.f32.xlu0 %v1498
    %v1542 = vpop.xlane.xlu0 %1541
    %1543 = vadd.xlane.f32.xlu0 %v1499
    %v1544 = vpop.xlane.xlu0 %1543
    %1545 = vadd.xlane.f32.xlu0 %v1500
    %v1546 = vpop.xlane.xlu0 %1545
    %1547 = vadd.xlane.f32.xlu0 %v1501
    %v1548 = vpop.xlane.xlu0 %1547
    %1549 = vadd.xlane.f32.xlu0 %v1502
    %v1550 = vpop.xlane.xlu0 %1549
    %1551 = vadd.xlane.f32.xlu0 %v1503
    %v1552 = vpop.xlane.xlu0 %1551
    %1553 = vadd.xlane.f32.xlu0 %v1504
    %v1554 = vpop.xlane.xlu0 %1553
    %1555 = vadd.xlane.f32.xlu0 %v1505
    %v1556 = vpop.xlane.xlu0 %1555
    %1557 = vadd.xlane.f32.xlu0 %v1506
    %v1558 = vpop.xlane.xlu0 %1557
    %1559 = vadd.xlane.f32.xlu0 %v1507
    %v1560 = vpop.xlane.xlu0 %1559
    %1561 = vadd.xlane.f32.xlu0 %v1508
    %v1562 = vpop.xlane.xlu0 %1561
    %1563 = vadd.xlane.f32.xlu0 %v1509
    %v1564 = vpop.xlane.xlu0 %1563
    %1565 = vadd.xlane.f32.xlu0 %v1510
    %v1566 = vpop.xlane.xlu0 %1565
    %1567 = vadd.xlane.f32.xlu0 %v1511
    %v1568 = vpop.xlane.xlu0 %1567
    %1569 = vadd.xlane.f32.xlu0 %v1512
    %v1570 = vpop.xlane.xlu0 %1569
    %1571 = vadd.xlane.f32.xlu0 %v1513
    %v1572 = vpop.xlane.xlu0 %1571
    %1573 = vadd.xlane.f32.xlu0 %v1514
    %v1574 = vpop.xlane.xlu0 %1573
    %1575 = vadd.xlane.f32.xlu0 %v1515
    %v1576 = vpop.xlane.xlu0 %1575
    %1577 = vadd.xlane.f32.xlu0 %v1516
    %v1578 = vpop.xlane.xlu0 %1577
    %1579 = vadd.xlane.f32.xlu0 %v1517
    %v1580 = vpop.xlane.xlu0 %1579
    %1581 = vadd.xlane.f32.xlu0 %v1518
    %v1582 = vpop.xlane.xlu0 %1581
    %v1583 = vadd.f32 %v804, %v1520
    %v1584 = vadd.f32 %v806, %v1522
    %v1585 = vadd.f32 %v808, %v1524
    %v1586 = vadd.f32 %v810, %v1526
    %v1587 = vadd.f32 %v812, %v1528
    %v1588 = vadd.f32 %v814, %v1530
    %v1589 = vadd.f32 %v816, %v1532
    %v1590 = vadd.f32 %v818, %v1534
    %v1591 = vadd.f32 %v820, %v1536
    %v1592 = vadd.f32 %v822, %v1538
    %v1593 = vadd.f32 %v824, %v1540
    %v1594 = vadd.f32 %v826, %v1542
    %v1595 = vadd.f32 %v828, %v1544
    %v1596 = vadd.f32 %v830, %v1546
    %v1597 = vadd.f32 %v832, %v1548
    %v1598 = vadd.f32 %v834, %v1550
    %v1599 = vadd.f32 %v836, %v1552
    %v1600 = vadd.f32 %v838, %v1554
    %v1601 = vadd.f32 %v840, %v1556
    %v1602 = vadd.f32 %v842, %v1558
    %v1603 = vadd.f32 %v844, %v1560
    %v1604 = vadd.f32 %v846, %v1562
    %v1605 = vadd.f32 %v848, %v1564
    %v1606 = vadd.f32 %v850, %v1566
    %v1607 = vadd.f32 %v852, %v1568
    %v1608 = vadd.f32 %v854, %v1570
    %v1609 = vadd.f32 %v856, %v1572
    %v1610 = vadd.f32 %v858, %v1574
    %v1611 = vadd.f32 %v860, %v1576
    %v1612 = vadd.f32 %v862, %v1578
    %v1613 = vadd.f32 %v864, %v1580
    %v1614 = vadd.f32 %v866, %v1582
    %v1615 = vld [vmem:[#allocation2] sm:$0xff]
    %v1616 = vld [vmem:[#allocation2 + $0x8] sm:$0xff]
    %v1617 = vld [vmem:[#allocation2 + $0x10] sm:$0xff]
    %v1618 = vld [vmem:[#allocation2 + $0x18] sm:$0xff]
    %v1619 = vld [vmem:[%s4] sm:$0x1]
    %v1621 = vlaneseq
    %v1622 = vshrl.u32 %v1621, 7
    %v1623 = vsub.s32 0, %v1622
    %v1624 = vrot.slane %v1619, %v1623
    %v1658 = vlaneseq
    %v1659 = vand.u32 %v1658, 127
    %v1660 = vlaneseq
    %v1661 = vshrl.u32 %v1660, 7
    %v1662 = vsub.s32 %v1659, %v1661
    %v1663 = vrot.slane %v1583, %v1662
    %v1664 = vadd.s32 %v1659, 4294967288
    %v1665 = vlaneseq
    %v1666 = vshrl.u32 %v1665, 7
    %v1667 = vsub.s32 %v1664, %v1666
    %v1668 = vrot.slane %v1584, %v1667
    %vm1669 = vcmask 130112
    %v1670 = vsel %vm1669, %v1668, %v1663
    %v1671 = vadd.s32 %v1659, 4294967280
    %v1672 = vlaneseq
    %v1673 = vshrl.u32 %v1672, 7
    %v1674 = vsub.s32 %v1671, %v1673
    %v1675 = vrot.slane %v1585, %v1674
    %vm1676 = vcmask 195712
    %v1677 = vsel %vm1676, %v1675, %v1670
    %v1678 = vadd.s32 %v1659, 4294967272
    %v1679 = vlaneseq
    %v1680 = vshrl.u32 %v1679, 7
    %v1681 = vsub.s32 %v1678, %v1680
    %v1682 = vrot.slane %v1586, %v1681
    %vm1683 = vcmask 261312
    %v1684 = vsel %vm1683, %v1682, %v1677
    %v1685 = vlaneseq
    %v1686 = vshrl.u32 %v1685, 7
    %v1687 = vsub.s32 %v1659, %v1686
    %v1688 = vrot.slane %v1587, %v1687
    %v1689 = vlaneseq
    %v1690 = vshrl.u32 %v1689, 7
    %v1691 = vsub.s32 %v1664, %v1690
    %v1692 = vrot.slane %v1588, %v1691
    %v1693 = vsel %vm1669, %v1692, %v1688
    %v1694 = vlaneseq
    %v1695 = vshrl.u32 %v1694, 7
    %v1696 = vsub.s32 %v1671, %v1695
    %v1697 = vrot.slane %v1589, %v1696
    %v1698 = vsel %vm1676, %v1697, %v1693
    %v1699 = vlaneseq
    %v1700 = vshrl.u32 %v1699, 7
    %v1701 = vsub.s32 %v1678, %v1700
    %v1702 = vrot.slane %v1590, %v1701
    %v1703 = vsel %vm1683, %v1702, %v1698
    %v1704 = vlaneseq
    %v1705 = vshrl.u32 %v1704, 7
    %v1706 = vsub.s32 %v1659, %v1705
    %v1707 = vrot.slane %v1591, %v1706
    %v1708 = vlaneseq
    %v1709 = vshrl.u32 %v1708, 7
    %v1710 = vsub.s32 %v1664, %v1709
    %v1711 = vrot.slane %v1592, %v1710
    %v1712 = vsel %vm1669, %v1711, %v1707
    %v1713 = vlaneseq
    %v1714 = vshrl.u32 %v1713, 7
    %v1715 = vsub.s32 %v1671, %v1714
    %v1716 = vrot.slane %v1593, %v1715
    %v1717 = vsel %vm1676, %v1716, %v1712
    %v1718 = vlaneseq
    %v1719 = vshrl.u32 %v1718, 7
    %v1720 = vsub.s32 %v1678, %v1719
    %v1721 = vrot.slane %v1594, %v1720
    %v1722 = vsel %vm1683, %v1721, %v1717
    %v1723 = vlaneseq
    %v1724 = vshrl.u32 %v1723, 7
    %v1725 = vsub.s32 %v1659, %v1724
    %v1726 = vrot.slane %v1595, %v1725
    %v1727 = vlaneseq
    %v1728 = vshrl.u32 %v1727, 7
    %v1729 = vsub.s32 %v1664, %v1728
    %v1730 = vrot.slane %v1596, %v1729
    %v1731 = vsel %vm1669, %v1730, %v1726
    %v1732 = vlaneseq
    %v1733 = vshrl.u32 %v1732, 7
    %v1734 = vsub.s32 %v1671, %v1733
    %v1735 = vrot.slane %v1597, %v1734
    %v1736 = vsel %vm1676, %v1735, %v1731
    %v1737 = vlaneseq
    %v1738 = vshrl.u32 %v1737, 7
    %v1739 = vsub.s32 %v1678, %v1738
    %v1740 = vrot.slane %v1598, %v1739
    %v1741 = vsel %vm1683, %v1740, %v1736
    %v1742 = vlaneseq
    %v1743 = vshrl.u32 %v1742, 7
    %v1744 = vsub.s32 %v1659, %v1743
    %v1745 = vrot.slane %v1599, %v1744
    %v1746 = vlaneseq
    %v1747 = vshrl.u32 %v1746, 7
    %v1748 = vsub.s32 %v1664, %v1747
    %v1749 = vrot.slane %v1600, %v1748
    %v1750 = vsel %vm1669, %v1749, %v1745
    %v1751 = vlaneseq
    %v1752 = vshrl.u32 %v1751, 7
    %v1753 = vsub.s32 %v1671, %v1752
    %v1754 = vrot.slane %v1601, %v1753
    %v1755 = vsel %vm1676, %v1754, %v1750
    %v1756 = vlaneseq
    %v1757 = vshrl.u32 %v1756, 7
    %v1758 = vsub.s32 %v1678, %v1757
    %v1759 = vrot.slane %v1602, %v1758
    %v1760 = vsel %vm1683, %v1759, %v1755
    %v1761 = vlaneseq
    %v1762 = vshrl.u32 %v1761, 7
    %v1763 = vsub.s32 %v1659, %v1762
    %v1764 = vrot.slane %v1603, %v1763
    %v1765 = vlaneseq
    %v1766 = vshrl.u32 %v1765, 7
    %v1767 = vsub.s32 %v1664, %v1766
    %v1768 = vrot.slane %v1604, %v1767
    %v1769 = vsel %vm1669, %v1768, %v1764
    %v1770 = vlaneseq
    %v1771 = vshrl.u32 %v1770, 7
    %v1772 = vsub.s32 %v1671, %v1771
    %v1773 = vrot.slane %v1605, %v1772
    %v1774 = vsel %vm1676, %v1773, %v1769
    %v1775 = vlaneseq
    %v1776 = vshrl.u32 %v1775, 7
    %v1777 = vsub.s32 %v1678, %v1776
    %v1778 = vrot.slane %v1606, %v1777
    %v1779 = vsel %vm1683, %v1778, %v1774
    %v1780 = vlaneseq
    %v1781 = vshrl.u32 %v1780, 7
    %v1782 = vsub.s32 %v1659, %v1781
    %v1783 = vrot.slane %v1607, %v1782
    %v1784 = vlaneseq
    %v1785 = vshrl.u32 %v1784, 7
    %v1786 = vsub.s32 %v1664, %v1785
    %v1787 = vrot.slane %v1608, %v1786
    %v1788 = vsel %vm1669, %v1787, %v1783
    %v1789 = vlaneseq
    %v1790 = vshrl.u32 %v1789, 7
    %v1791 = vsub.s32 %v1671, %v1790
    %v1792 = vrot.slane %v1609, %v1791
    %v1793 = vsel %vm1676, %v1792, %v1788
    %v1794 = vlaneseq
    %v1795 = vshrl.u32 %v1794, 7
    %v1796 = vsub.s32 %v1678, %v1795
    %v1797 = vrot.slane %v1610, %v1796
    %v1798 = vsel %vm1683, %v1797, %v1793
    %v1799 = vlaneseq
    %v1800 = vshrl.u32 %v1799, 7
    %v1801 = vsub.s32 %v1659, %v1800
    %v1802 = vrot.slane %v1611, %v1801
    %v1803 = vlaneseq
    %v1804 = vshrl.u32 %v1803, 7
    %v1805 = vsub.s32 %v1664, %v1804
    %v1806 = vrot.slane %v1612, %v1805
    %v1807 = vsel %vm1669, %v1806, %v1802
    %v1808 = vlaneseq
    %v1809 = vshrl.u32 %v1808, 7
    %v1810 = vsub.s32 %v1671, %v1809
    %v1811 = vrot.slane %v1613, %v1810
    %v1812 = vsel %vm1676, %v1811, %v1807
    %v1813 = vlaneseq
    %v1814 = vshrl.u32 %v1813, 7
    %v1815 = vsub.s32 %v1678, %v1814
    %v1816 = vrot.slane %v1614, %v1815
    %v1817 = vsel %vm1683, %v1816, %v1812
    %vm1818 = vcmask 1041409
    %v1819 = vsel %vm1818, %v1703, %v1684
    %vm1820 = vcmask 1042434
    %v1821 = vsel %vm1820, %v1722, %v1819
    %vm1822 = vcmask 1043459
    %v1823 = vsel %vm1822, %v1741, %v1821
    %vm1824 = vcmask 1044484
    %v1825 = vsel %vm1824, %v1760, %v1823
    %vm1826 = vcmask 1045509
    %v1827 = vsel %vm1826, %v1779, %v1825
    %vm1828 = vcmask 1046534
    %v1829 = vsel %vm1828, %v1798, %v1827
    %vm1830 = vcmask 1047559
    %v1831 = vsel %vm1830, %v1817, %v1829
    %vm1832 = vcmask 261120
    %v1833 = vsel %vm1832, %v1831, 0
    %1835 = vmatprep.subr.mxu0 0.0
    %1836 = vmatpush1.msra.mxu0 %v1615
    %1837 = vmatprep.subr.mxu0 0.0
    %1838 = vmatpush1.msra.mxu0 %v1616
    %1839 = vmatprep.subr.mxu0 0.0
    %1840 = vmatpush1.msra.mxu0 %v1617
    %1841 = vmatprep.subr.mxu0 0.0
    %1842 = vmatpush1.msra.mxu0 %v1618
    %1843 = vmatprep.subr.mxu0 0.0
    %1844 = vmatpush1.msra.mxu0 0.0
    %1845 = vmatprep.subr.mxu0 0.0
    %1846 = vmatpush1.msra.mxu0 0.0
    %1847 = vmatprep.subr.mxu0 0.0
    %1848 = vmatpush1.msra.mxu0 0.0
    %1849 = vmatprep.subr.mxu0 0.0
    %1850 = vmatpush1.msra.mxu0 0.0
    %1851 = vmatprep.subr.mxu0 0.0
    %1852 = vmatpush1.msra.mxu0 0.0
    %1853 = vmatprep.subr.mxu0 0.0
    %1854 = vmatpush1.msra.mxu0 0.0
    %1855 = vmatprep.subr.mxu0 0.0
    %1856 = vmatpush1.msra.mxu0 0.0
    %1857 = vmatprep.subr.mxu0 0.0
    %1858 = vmatpush1.msra.mxu0 0.0
    %1859 = vmatprep.subr.mxu0 0.0
    %1860 = vmatpush1.msra.mxu0 0.0
    %1861 = vmatprep.subr.mxu0 0.0
    %1862 = vmatpush1.msra.mxu0 0.0
    %1863 = vmatprep.subr.mxu0 0.0
    %1864 = vmatpush1.msra.mxu0 0.0
    %1865 = vmatprep.subr.mxu0 0.0
    %1866 = vmatpush1.msra.mxu0 0.0
    %1867 = vmatprep.subr.mxu0 0.0
    %1868 = vmatpush1.msra.mxu0 0.0
    %1869 = vmatprep.subr.mxu0 0.0
    %1870 = vmatpush1.msra.mxu0 0.0
    %1871 = vmatprep.subr.mxu0 0.0
    %1872 = vmatpush1.msra.mxu0 0.0
    %1873 = vmatprep.subr.mxu0 0.0
    %1874 = vmatpush1.msra.mxu0 0.0
    %1875 = vmatprep.subr.mxu0 0.0
    %1876 = vmatpush1.msra.mxu0 0.0
    %1877 = vmatprep.subr.mxu0 0.0
    %1878 = vmatpush1.msra.mxu0 0.0
    %1879 = vmatprep.subr.mxu0 0.0
    %1880 = vmatpush1.msra.mxu0 0.0
    %1881 = vmatprep.subr.mxu0 0.0
    %1882 = vmatpush1.msra.mxu0 0.0
    %1883 = vmatprep.subr.mxu0 0.0
    %1884 = vmatpush1.msra.mxu0 0.0
    %1885 = vmatprep.subr.mxu0 0.0
    %1886 = vmatpush1.msra.mxu0 0.0
    %1887 = vmatprep.subr.mxu0 0.0
    %1888 = vmatpush1.msra.mxu0 0.0
    %1889 = vmatprep.subr.mxu0 0.0
    %1890 = vmatpush1.msra.mxu0 0.0
    %1891 = vmatprep.subr.mxu0 0.0
    %1892 = vmatpush1.msra.mxu0 0.0
    %1893 = vmatprep.subr.mxu0 0.0
    %1894 = vmatpush1.msra.mxu0 0.0
    %1895 = vmatprep.subr.mxu0 0.0
    %1896 = vmatpush1.msra.mxu0 0.0
    %1897 = vmatprep.subr.mxu0 0.0
    %1898 = vmatpush1.msra.mxu0 0.0
    %1899 = vmatprep.mubr.f32.mxu0 0.0
    %1900 = vmatmul.mubr.f32.gmra.mrb[0].mxu0 %v1833
    %v1901 = vpop.f32.mrb[0].mxu0
    %v1902 = vadd.f32 %v1624, %v1901
    %v1903 = vpop.f32.mrb[0].mxu0
    %1904 = vdwg.mxu0
    %v1905 = vmul.f32 %v1902, %v1902
    %v1906 = vmul.f32 %v1902, %v1905
    %v1907 = vmul.f32 %v1906, 0.044715
    %v1908 = vadd.f32 %v1902, %v1907
    %v1909 = vmul.f32 %v1908, 0.7978846
    %v1910 = vtanh.pop %v1909
    %v1911 = vadd.f32 %v1910, 1.0
    %v1912 = vmul.f32 %v1911, 0.5
    %v1913 = vmul.f32 %v1902, %v1912
    %v1914 = vld [vmem:[#allocation5] sm:$0xff]
    %v1915 = vld [vmem:[#allocation5 + $0x8] sm:$0xff]
    %v1916 = vld [vmem:[#allocation5 + $0x10] sm:$0xff]
    %v1917 = vld [vmem:[#allocation5 + $0x18] sm:$0xff]
    %v1918 = vld [vmem:[#allocation5 + $0x20] sm:$0xff]
    %v1919 = vld [vmem:[#allocation5 + $0x28] sm:$0xff]
    %v1920 = vld [vmem:[#allocation5 + $0x30] sm:$0xff]
    %v1921 = vld [vmem:[#allocation5 + $0x38] sm:$0xff]
    %v1922 = vld [vmem:[%s6] sm:$0x1]
    %v1924 = vlaneseq
    %v1925 = vshrl.u32 %v1924, 7
    %v1926 = vsub.s32 0, %v1925
    %v1927 = vrot.slane %v1922, %v1926
    %vm1929 = vcmask 523264
    %v1931 = vsel %vm1929, %v1913, 0
    %1933 = vmatprep.subr.mxu0 0.0
    %1934 = vmatpush1.msra.mxu0 %v1914
    %1935 = vmatprep.subr.mxu0 0.0
    %1936 = vmatpush1.msra.mxu0 %v1915
    %1937 = vmatprep.subr.mxu0 0.0
    %1938 = vmatpush1.msra.mxu0 %v1916
    %1939 = vmatprep.subr.mxu0 0.0
    %1940 = vmatpush1.msra.mxu0 %v1917
    %1941 = vmatprep.subr.mxu0 0.0
    %1942 = vmatpush1.msra.mxu0 %v1918
    %1943 = vmatprep.subr.mxu0 0.0
    %1944 = vmatpush1.msra.mxu0 %v1919
    %1945 = vmatprep.subr.mxu0 0.0
    %1946 = vmatpush1.msra.mxu0 %v1920
    %1947 = vmatprep.subr.mxu0 0.0
    %1948 = vmatpush1.msra.mxu0 %v1921
    %1949 = vmatprep.subr.mxu0 0.0
    %1950 = vmatpush1.msra.mxu0 0.0
    %1951 = vmatprep.subr.mxu0 0.0
    %1952 = vmatpush1.msra.mxu0 0.0
    %1953 = vmatprep.subr.mxu0 0.0
    %1954 = vmatpush1.msra.mxu0 0.0
    %1955 = vmatprep.subr.mxu0 0.0
    %1956 = vmatpush1.msra.mxu0 0.0
    %1957 = vmatprep.subr.mxu0 0.0
    %1958 = vmatpush1.msra.mxu0 0.0
    %1959 = vmatprep.subr.mxu0 0.0
    %1960 = vmatpush1.msra.mxu0 0.0
    %1961 = vmatprep.subr.mxu0 0.0
    %1962 = vmatpush1.msra.mxu0 0.0
    %1963 = vmatprep.subr.mxu0 0.0
    %1964 = vmatpush1.msra.mxu0 0.0
    %1965 = vmatprep.subr.mxu0 0.0
    %1966 = vmatpush1.msra.mxu0 0.0
    %1967 = vmatprep.subr.mxu0 0.0
    %1968 = vmatpush1.msra.mxu0 0.0
    %1969 = vmatprep.subr.mxu0 0.0
    %1970 = vmatpush1.msra.mxu0 0.0
    %1971 = vmatprep.subr.mxu0 0.0
    %1972 = vmatpush1.msra.mxu0 0.0
    %1973 = vmatprep.subr.mxu0 0.0
    %1974 = vmatpush1.msra.mxu0 0.0
    %1975 = vmatprep.subr.mxu0 0.0
    %1976 = vmatpush1.msra.mxu0 0.0
    %1977 = vmatprep.subr.mxu0 0.0
    %1978 = vmatpush1.msra.mxu0 0.0
    %1979 = vmatprep.subr.mxu0 0.0
    %1980 = vmatpush1.msra.mxu0 0.0
    %1981 = vmatprep.subr.mxu0 0.0
    %1982 = vmatpush1.msra.mxu0 0.0
    %1983 = vmatprep.subr.mxu0 0.0
    %1984 = vmatpush1.msra.mxu0 0.0
    %1985 = vmatprep.subr.mxu0 0.0
    %1986 = vmatpush1.msra.mxu0 0.0
    %1987 = vmatprep.subr.mxu0 0.0
    %1988 = vmatpush1.msra.mxu0 0.0
    %1989 = vmatprep.subr.mxu0 0.0
    %1990 = vmatpush1.msra.mxu0 0.0
    %1991 = vmatprep.subr.mxu0 0.0
    %1992 = vmatpush1.msra.mxu0 0.0
    %1993 = vmatprep.subr.mxu0 0.0
    %1994 = vmatpush1.msra.mxu0 0.0
    %1995 = vmatprep.subr.mxu0 0.0
    %1996 = vmatpush1.msra.mxu0 0.0
    %1997 = vmatprep.mubr.f32.mxu0 0.0
    %1998 = vmatmul.mubr.f32.gmra.mrb[0].mxu0 %v1931
    %v1999 = vpop.f32.mrb[0].mxu0
    %v2000 = vadd.f32 %v1927, %v1999
    %v2001 = vpop.f32.mrb[0].mxu0
    %2002 = vdwg.mxu0
    %2003 = vst [vmem:[#allocation7] sm:$0xff] %v2000
    // Predicated region
    $region38: #{tpu_custom_call.1} parent=1 // pred_check
      _
    $region39: #{tpu_custom_call.1} parent=1 // pred_check_branch
      %2005 = sbr.rel (0) target = $region41
    $region40: #{tpu_custom_call.1} parent=1 // pred_region
      %s2007 = ssub.s32 128, 128
      %2008 = vsyncadd [#allocation4], %s2007
      %s2010 = sshll.u32 [#allocation7], 4
      %s2011 = int_to_ptr.vmem [resolvable:$true] %s2010
      %2013 = dma.vmem_to_hbm [thread:$0]  %s2011, 128, %s7, [#allocation4]
    $region41: #{tpu_custom_call.1} parent=1 // pred_fallthru
      _
    // Predicated region
    $region42: #{tpu_custom_call.1} parent=1 // pred_check
      _
    $region43: #{tpu_custom_call.1} parent=1 // pred_check_branch
      %2015 = sbr.rel (0) target = $region45
    $region44: #{tpu_custom_call.1} parent=1 // pred_region
      %2016 = dma.done [#allocation4], 128
    $region45: #{tpu_custom_call.1} parent=1 // pred_fallthru
      _
    %2017 = vsyncpa [#allocation3], 1
    %2018 = vsyncpa [#allocation6], 1
    %2019 = vsyncpa [#allocation4], 1

</llo_original>
